<compile_context>
chip_gen: v6e
topology: v6e:2x2x1
jax: 0.10.0
libtpu: 0.0.40
codegen_flags: <defaults>
</compile_context>

<pallas_src>
import math

import jax
import jax.numpy as jnp
from jax.experimental import pallas as pl
from jax.experimental.pallas import tpu as pltpu  # noqa: F401  (TPU backend)

# ----------------------------- config -----------------------------
HIDDEN = 32           # config.hidden_size
NUM_HEADS = 4         # config.num_attention_heads
HEAD_DIM = HIDDEN // NUM_HEADS
SCAN_HIDDEN = 64      # config.scan_hidden_size
INTERMEDIATE = 64     # config.intermediate_size
LN_EPS = 1e-12

BATCH = 2
SEQ = 8               # text sequence length
SCAN_SEQ = 16         # scan-encoding sequence length


# ----------------------------- fused kernel -----------------------------
def _layernorm(y, gamma, beta):
    mu = jnp.mean(y, axis=-1, keepdims=True)
    var = jnp.mean(jnp.square(y - mu), axis=-1, keepdims=True)
    return (y - mu) * jax.lax.rsqrt(var + jnp.float32(LN_EPS)) * gamma + beta


def _bert_scan_layer_kernel(hs_ref, scan_ref,
                            qw_ref, qb_ref, kvw_ref, kvb_ref, ow_ref, ob_ref,
                            ln1g_ref, ln1b_ref,
                            iw_ref, ib_ref, fw_ref, fb_ref,
                            ln2g_ref, ln2b_ref,
                            o_ref):
    B, S, H = hs_ref.shape
    T = scan_ref.shape[1]

    x2d = hs_ref[...].reshape(B * S, H)                        # [B*S, H]
    scan2d = scan_ref[...].reshape(B * T, scan_ref.shape[2])   # [B*T, scan_H]

    # --- projections: Q from hidden_states, packed K|V from scan_encodings ---
    q = jnp.dot(x2d, qw_ref[...], preferred_element_type=jnp.float32) + qb_ref[...]
    kv = jnp.dot(scan2d, kvw_ref[...], preferred_element_type=jnp.float32) + kvb_ref[...]
    k = kv[:, :H]
    v = kv[:, H:]

    # --- multi-head scan cross-attention, fully in VMEM ---
    # (B, NUM_HEADS) loop is statically unrolled inside the single kernel; the
    # "transpose_for_scores" of the reference is just static lane slicing here.
    scale = jnp.float32(1.0 / math.sqrt(HEAD_DIM))
    batch_ctx = []
    for b in range(B):
        q_b = q[b * S:(b + 1) * S, :]
        k_b = k[b * T:(b + 1) * T, :]
        v_b = v[b * T:(b + 1) * T, :]
        head_ctx = []
        for h in range(NUM_HEADS):
            lo, hi = h * HEAD_DIM, (h + 1) * HEAD_DIM
            s = jax.lax.dot_general(q_b[:, lo:hi], k_b[:, lo:hi],
                                    (((1,), (1,)), ((), ())),
                                    preferred_element_type=jnp.float32) * scale
            s = s - jnp.max(s, axis=-1, keepdims=True)
            p = jnp.exp(s)
            p = p * pl.reciprocal(jnp.sum(p, axis=-1, keepdims=True), approx=True)
            head_ctx.append(jnp.dot(p, v_b[:, lo:hi],
                                    preferred_element_type=jnp.float32))
        batch_ctx.append(jnp.concatenate(head_ctx, axis=-1))    # [S, H]
    ctx = jnp.concatenate(batch_ctx, axis=0)                    # [B*S, H]

    # --- BertSelfOutput: dense -> dropout(identity) -> LN(x + hidden_states) ---
    attn_out = jnp.dot(ctx, ow_ref[...], preferred_element_type=jnp.float32) + ob_ref[...]
    x1 = _layernorm(attn_out + x2d, ln1g_ref[...], ln1b_ref[...])

    # --- BertIntermediate: dense + exact-erf GELU ---
    inter = jnp.dot(x1, iw_ref[...], preferred_element_type=jnp.float32) + ib_ref[...]
    inter = inter * 0.5 * (1.0 + jax.lax.erf(inter * jnp.float32(1.0 / math.sqrt(2.0))))

    # --- BertOutput: dense -> dropout(identity) -> LN(x + scan_attention_output) ---
    ffn = jnp.dot(inter, fw_ref[...], preferred_element_type=jnp.float32) + fb_ref[...]
    out = _layernorm(ffn + x1, ln2g_ref[...], ln2b_ref[...])

    o_ref[...] = out.reshape(B, S, H).astype(o_ref.dtype)


# ----------------------------- wrapper -----------------------------
def bert_scan_layer(params, scan_encodings, hidden_states, attention_mask=None):
    """Fused BertScanLayer.forward. Single pallas_call, whole layer in VMEM."""
    # attention_mask is accepted for interface parity with the PyTorch module
    # but cannot affect the output: BertScanAttentionHeads never applies it and
    # the self-attention block that would have consumed it is dead code (its
    # result is unused by BertScanLayer.forward), so it is not computed.
    del attention_mask
    B, S, H = hidden_states.shape
    p = params
    r = lambda a: a.reshape(1, -1)  # biases / LN params as (1, N) rows
    return pl.pallas_call(
        _bert_scan_layer_kernel,
        out_shape=jax.ShapeDtypeStruct((B, S, H), hidden_states.dtype),
    )(hidden_states, scan_encodings,
      p["q_w"], r(p["q_b"]),
      p["kv_w"], r(p["kv_b"]),
      p["o_w"], r(p["o_b"]),
      r(p["ln1_g"]), r(p["ln1_b"]),
      p["inter_w"], r(p["inter_b"]),
      p["out_w"], r(p["out_b"]),
      r(p["ln2_g"]), r(p["ln2_b"]))


# ----------------------------- parameter init -----------------------------
def _init_linear(key, in_dim, out_dim):
    kw, kb = jax.random.split(key)
    w = jax.random.normal(kw, (in_dim, out_dim), jnp.float32) * 0.02
    b = jax.random.normal(kb, (out_dim,), jnp.float32) * 0.02
    return w, b


def init_params(key):
    keys = jax.random.split(key, 6)
    q_w, q_b = _init_linear(keys[0], HIDDEN, HIDDEN)
    k_w, k_b = _init_linear(keys[1], SCAN_HIDDEN, HIDDEN)
    v_w, v_b = _init_linear(keys[2], SCAN_HIDDEN, HIDDEN)
    o_w, o_b = _init_linear(keys[3], HIDDEN, HIDDEN)
    inter_w, inter_b = _init_linear(keys[4], HIDDEN, INTERMEDIATE)
    out_w, out_b = _init_linear(keys[5], INTERMEDIATE, HIDDEN)
    # Note: the dead BertAttention block's params are not created since its
    # output never reaches the layer output.
    return dict(
        q_w=q_w, q_b=q_b,
        kv_w=jnp.concatenate([k_w, v_w], axis=1),   # packed K|V projection
        kv_b=jnp.concatenate([k_b, v_b], axis=0),
        o_w=o_w, o_b=o_b,
        ln1_g=jnp.ones((HIDDEN,), jnp.float32),
        ln1_b=jnp.zeros((HIDDEN,), jnp.float32),
        inter_w=inter_w, inter_b=inter_b,
        out_w=out_w, out_b=out_b,
        ln2_g=jnp.ones((HIDDEN,), jnp.float32),
        ln2_b=jnp.zeros((HIDDEN,), jnp.float32),
    )


# ----------------------------- main -----------------------------
if __name__ == "__main__":
    key = jax.random.PRNGKey(0)
    kp, kh, ks = jax.random.split(key, 3)

    params = init_params(kp)
    hidden_states = jax.random.normal(kh, (BATCH, SEQ, HIDDEN), jnp.float32)
    scan_encodings = jax.random.normal(ks, (BATCH, SCAN_SEQ, SCAN_HIDDEN), jnp.float32)

    # Extended attention mask (BERT convention): [B, 1, 1, S], 0 = attend,
    # -10000 = masked.  Passed for interface parity; has no effect on output
    # (see wrapper comment).
    token_mask = jnp.ones((BATCH, SEQ), jnp.float32).at[1, -2:].set(0.0)
    ext_mask = (1.0 - token_mask)[:, None, None, :] * -10000.0

    out = bert_scan_layer(params, scan_encodings, hidden_states, ext_mask)
    out = jax.block_until_ready(out)
    assert out.shape == (BATCH, SEQ, HIDDEN)
    assert bool(jnp.all(jnp.isfinite(out)))
    print("KERNEL_OK")
</pallas_src>

<mosaic_0001>
module attributes {stable_mosaic.version = 11 : i64} {
  func.func @_bert_scan_layer_kernel(%arg0: memref<2x8x32xf32, #tpu.memory_space<vmem>>, %arg1: memref<2x16x64xf32, #tpu.memory_space<vmem>>, %arg2: memref<32x32xf32, #tpu.memory_space<vmem>>, %arg3: memref<1x32xf32, #tpu.memory_space<vmem>>, %arg4: memref<64x64xf32, #tpu.memory_space<vmem>>, %arg5: memref<1x64xf32, #tpu.memory_space<vmem>>, %arg6: memref<32x32xf32, #tpu.memory_space<vmem>>, %arg7: memref<1x32xf32, #tpu.memory_space<vmem>>, %arg8: memref<1x32xf32, #tpu.memory_space<vmem>>, %arg9: memref<1x32xf32, #tpu.memory_space<vmem>>, %arg10: memref<32x64xf32, #tpu.memory_space<vmem>>, %arg11: memref<1x64xf32, #tpu.memory_space<vmem>>, %arg12: memref<64x32xf32, #tpu.memory_space<vmem>>, %arg13: memref<1x32xf32, #tpu.memory_space<vmem>>, %arg14: memref<1x32xf32, #tpu.memory_space<vmem>>, %arg15: memref<1x32xf32, #tpu.memory_space<vmem>>, %arg16: memref<2x8x32xf32, #tpu.memory_space<vmem>>) attributes {dimension_semantics = [], scalar_prefetch = 0 : i64, scratch_operands = 0 : i64, tpu.core_type = #tpu.core_type<tc>} {
    %c0 = arith.constant 0 : index
    %c0_0 = arith.constant 0 : index
    %c0_1 = arith.constant 0 : index
    %0 = vector.load %arg0[%c0, %c0_0, %c0_1] : memref<2x8x32xf32, #tpu.memory_space<vmem>>, vector<2x8x32xf32>
    %1 = vector.shape_cast %0 : vector<2x8x32xf32> to vector<16x32xf32>
    %c0_2 = arith.constant 0 : index
    %c0_3 = arith.constant 0 : index
    %c0_4 = arith.constant 0 : index
    %2 = vector.load %arg1[%c0_2, %c0_3, %c0_4] : memref<2x16x64xf32, #tpu.memory_space<vmem>>, vector<2x16x64xf32>
    %3 = vector.shape_cast %2 : vector<2x16x64xf32> to vector<32x64xf32>
    %c0_5 = arith.constant 0 : index
    %c0_6 = arith.constant 0 : index
    %4 = vector.load %arg2[%c0_5, %c0_6] : memref<32x32xf32, #tpu.memory_space<vmem>>, vector<32x32xf32>
    %cst = arith.constant dense<0.000000e+00> : vector<16x32xf32>
    %5 = tpu.matmul %1, %4, %cst {dimension_numbers = #tpu.dot_dimension_numbers<[1], [0], [0], [1], [0, 0, 1, 1], [], []>} : vector<16x32xf32>, vector<32x32xf32>, vector<16x32xf32> -> vector<16x32xf32>
    %c0_7 = arith.constant 0 : index
    %c0_8 = arith.constant 0 : index
    %6 = vector.load %arg3[%c0_7, %c0_8] : memref<1x32xf32, #tpu.memory_space<vmem>>, vector<1x32xf32>
    %7 = vector.broadcast %6 : vector<1x32xf32> to vector<16x32xf32>
    %8 = arith.addf %5, %7 : vector<16x32xf32>
    %c0_9 = arith.constant 0 : index
    %c0_10 = arith.constant 0 : index
    %9 = vector.load %arg4[%c0_9, %c0_10] : memref<64x64xf32, #tpu.memory_space<vmem>>, vector<64x64xf32>
    %cst_11 = arith.constant dense<0.000000e+00> : vector<32x64xf32>
    %10 = tpu.matmul %3, %9, %cst_11 {dimension_numbers = #tpu.dot_dimension_numbers<[1], [0], [0], [1], [0, 0, 1, 1], [], []>} : vector<32x64xf32>, vector<64x64xf32>, vector<32x64xf32> -> vector<32x64xf32>
    %c0_12 = arith.constant 0 : index
    %c0_13 = arith.constant 0 : index
    %11 = vector.load %arg5[%c0_12, %c0_13] : memref<1x64xf32, #tpu.memory_space<vmem>>, vector<1x64xf32>
    %12 = vector.broadcast %11 : vector<1x64xf32> to vector<32x64xf32>
    %13 = arith.addf %10, %12 : vector<32x64xf32>
    %14 = vector.extract_strided_slice %13 {offsets = [0, 0], sizes = [32, 32], strides = [1, 1]} : vector<32x64xf32> to vector<32x32xf32>
    %15 = vector.extract_strided_slice %13 {offsets = [0, 32], sizes = [32, 32], strides = [1, 1]} : vector<32x64xf32> to vector<32x32xf32>
    %16 = vector.extract_strided_slice %8 {offsets = [0, 0], sizes = [8, 32], strides = [1, 1]} : vector<16x32xf32> to vector<8x32xf32>
    %17 = vector.extract_strided_slice %14 {offsets = [0, 0], sizes = [16, 32], strides = [1, 1]} : vector<32x32xf32> to vector<16x32xf32>
    %18 = vector.extract_strided_slice %15 {offsets = [0, 0], sizes = [16, 32], strides = [1, 1]} : vector<32x32xf32> to vector<16x32xf32>
    %19 = vector.extract_strided_slice %16 {offsets = [0, 0], sizes = [8, 8], strides = [1, 1]} : vector<8x32xf32> to vector<8x8xf32>
    %20 = vector.extract_strided_slice %17 {offsets = [0, 0], sizes = [16, 8], strides = [1, 1]} : vector<16x32xf32> to vector<16x8xf32>
    %cst_14 = arith.constant dense<0.000000e+00> : vector<8x16xf32>
    %21 = tpu.matmul %19, %20, %cst_14 {dimension_numbers = #tpu.dot_dimension_numbers<[1], [1], [0], [0], [0, 0, 1, 0], [], []>} : vector<8x8xf32>, vector<16x8xf32>, vector<8x16xf32> -> vector<8x16xf32>
    %cst_15 = arith.constant 0.353553385 : f32
    %22 = vector.broadcast %cst_15 : f32 to vector<8x16xf32>
    %23 = arith.mulf %21, %22 : vector<8x16xf32>
    %cst_16 = arith.constant dense<0xFF800000> : vector<8xf32>
    %24 = vector.multi_reduction <maximumf>, %23, %cst_16 [1] : vector<8x16xf32> to vector<8xf32>
    %25 = vector.shape_cast %24 : vector<8xf32> to vector<8x1xf32>
    %26 = vector.broadcast %25 : vector<8x1xf32> to vector<8x16xf32>
    %27 = arith.subf %23, %26 : vector<8x16xf32>
    %28 = math.exp %27 : vector<8x16xf32>
    %cst_17 = arith.constant dense<0.000000e+00> : vector<8xf32>
    %29 = vector.multi_reduction <add>, %28, %cst_17 [1] : vector<8x16xf32> to vector<8xf32>
    %30 = vector.shape_cast %29 : vector<8xf32> to vector<8x1xf32>
    %31 = tpu.reciprocal %30 {approx = true} : vector<8x1xf32> -> vector<8x1xf32>
    %32 = vector.broadcast %31 : vector<8x1xf32> to vector<8x16xf32>
    %33 = arith.mulf %28, %32 : vector<8x16xf32>
    %34 = vector.extract_strided_slice %18 {offsets = [0, 0], sizes = [16, 8], strides = [1, 1]} : vector<16x32xf32> to vector<16x8xf32>
    %cst_18 = arith.constant dense<0.000000e+00> : vector<8x8xf32>
    %35 = tpu.matmul %33, %34, %cst_18 {dimension_numbers = #tpu.dot_dimension_numbers<[1], [0], [0], [1], [0, 0, 1, 1], [], []>} : vector<8x16xf32>, vector<16x8xf32>, vector<8x8xf32> -> vector<8x8xf32>
    %36 = vector.extract_strided_slice %16 {offsets = [0, 8], sizes = [8, 8], strides = [1, 1]} : vector<8x32xf32> to vector<8x8xf32>
    %37 = vector.extract_strided_slice %17 {offsets = [0, 8], sizes = [16, 8], strides = [1, 1]} : vector<16x32xf32> to vector<16x8xf32>
    %cst_19 = arith.constant dense<0.000000e+00> : vector<8x16xf32>
    %38 = tpu.matmul %36, %37, %cst_19 {dimension_numbers = #tpu.dot_dimension_numbers<[1], [1], [0], [0], [0, 0, 1, 0], [], []>} : vector<8x8xf32>, vector<16x8xf32>, vector<8x16xf32> -> vector<8x16xf32>
    %cst_20 = arith.constant 0.353553385 : f32
    %39 = vector.broadcast %cst_20 : f32 to vector<8x16xf32>
    %40 = arith.mulf %38, %39 : vector<8x16xf32>
    %cst_21 = arith.constant dense<0xFF800000> : vector<8xf32>
    %41 = vector.multi_reduction <maximumf>, %40, %cst_21 [1] : vector<8x16xf32> to vector<8xf32>
    %42 = vector.shape_cast %41 : vector<8xf32> to vector<8x1xf32>
    %43 = vector.broadcast %42 : vector<8x1xf32> to vector<8x16xf32>
    %44 = arith.subf %40, %43 : vector<8x16xf32>
    %45 = math.exp %44 : vector<8x16xf32>
    %cst_22 = arith.constant dense<0.000000e+00> : vector<8xf32>
    %46 = vector.multi_reduction <add>, %45, %cst_22 [1] : vector<8x16xf32> to vector<8xf32>
    %47 = vector.shape_cast %46 : vector<8xf32> to vector<8x1xf32>
    %48 = tpu.reciprocal %47 {approx = true} : vector<8x1xf32> -> vector<8x1xf32>
    %49 = vector.broadcast %48 : vector<8x1xf32> to vector<8x16xf32>
    %50 = arith.mulf %45, %49 : vector<8x16xf32>
    %51 = vector.extract_strided_slice %18 {offsets = [0, 8], sizes = [16, 8], strides = [1, 1]} : vector<16x32xf32> to vector<16x8xf32>
    %cst_23 = arith.constant dense<0.000000e+00> : vector<8x8xf32>
    %52 = tpu.matmul %50, %51, %cst_23 {dimension_numbers = #tpu.dot_dimension_numbers<[1], [0], [0], [1], [0, 0, 1, 1], [], []>} : vector<8x16xf32>, vector<16x8xf32>, vector<8x8xf32> -> vector<8x8xf32>
    %53 = vector.extract_strided_slice %16 {offsets = [0, 16], sizes = [8, 8], strides = [1, 1]} : vector<8x32xf32> to vector<8x8xf32>
    %54 = vector.extract_strided_slice %17 {offsets = [0, 16], sizes = [16, 8], strides = [1, 1]} : vector<16x32xf32> to vector<16x8xf32>
    %cst_24 = arith.constant dense<0.000000e+00> : vector<8x16xf32>
    %55 = tpu.matmul %53, %54, %cst_24 {dimension_numbers = #tpu.dot_dimension_numbers<[1], [1], [0], [0], [0, 0, 1, 0], [], []>} : vector<8x8xf32>, vector<16x8xf32>, vector<8x16xf32> -> vector<8x16xf32>
    %cst_25 = arith.constant 0.353553385 : f32
    %56 = vector.broadcast %cst_25 : f32 to vector<8x16xf32>
    %57 = arith.mulf %55, %56 : vector<8x16xf32>
    %cst_26 = arith.constant dense<0xFF800000> : vector<8xf32>
    %58 = vector.multi_reduction <maximumf>, %57, %cst_26 [1] : vector<8x16xf32> to vector<8xf32>
    %59 = vector.shape_cast %58 : vector<8xf32> to vector<8x1xf32>
    %60 = vector.broadcast %59 : vector<8x1xf32> to vector<8x16xf32>
    %61 = arith.subf %57, %60 : vector<8x16xf32>
    %62 = math.exp %61 : vector<8x16xf32>
    %cst_27 = arith.constant dense<0.000000e+00> : vector<8xf32>
    %63 = vector.multi_reduction <add>, %62, %cst_27 [1] : vector<8x16xf32> to vector<8xf32>
    %64 = vector.shape_cast %63 : vector<8xf32> to vector<8x1xf32>
    %65 = tpu.reciprocal %64 {approx = true} : vector<8x1xf32> -> vector<8x1xf32>
    %66 = vector.broadcast %65 : vector<8x1xf32> to vector<8x16xf32>
    %67 = arith.mulf %62, %66 : vector<8x16xf32>
    %68 = vector.extract_strided_slice %18 {offsets = [0, 16], sizes = [16, 8], strides = [1, 1]} : vector<16x32xf32> to vector<16x8xf32>
    %cst_28 = arith.constant dense<0.000000e+00> : vector<8x8xf32>
    %69 = tpu.matmul %67, %68, %cst_28 {dimension_numbers = #tpu.dot_dimension_numbers<[1], [0], [0], [1], [0, 0, 1, 1], [], []>} : vector<8x16xf32>, vector<16x8xf32>, vector<8x8xf32> -> vector<8x8xf32>
    %70 = vector.extract_strided_slice %16 {offsets = [0, 24], sizes = [8, 8], strides = [1, 1]} : vector<8x32xf32> to vector<8x8xf32>
    %71 = vector.extract_strided_slice %17 {offsets = [0, 24], sizes = [16, 8], strides = [1, 1]} : vector<16x32xf32> to vector<16x8xf32>
    %cst_29 = arith.constant dense<0.000000e+00> : vector<8x16xf32>
    %72 = tpu.matmul %70, %71, %cst_29 {dimension_numbers = #tpu.dot_dimension_numbers<[1], [1], [0], [0], [0, 0, 1, 0], [], []>} : vector<8x8xf32>, vector<16x8xf32>, vector<8x16xf32> -> vector<8x16xf32>
    %cst_30 = arith.constant 0.353553385 : f32
    %73 = vector.broadcast %cst_30 : f32 to vector<8x16xf32>
    %74 = arith.mulf %72, %73 : vector<8x16xf32>
    %cst_31 = arith.constant dense<0xFF800000> : vector<8xf32>
    %75 = vector.multi_reduction <maximumf>, %74, %cst_31 [1] : vector<8x16xf32> to vector<8xf32>
    %76 = vector.shape_cast %75 : vector<8xf32> to vector<8x1xf32>
    %77 = vector.broadcast %76 : vector<8x1xf32> to vector<8x16xf32>
    %78 = arith.subf %74, %77 : vector<8x16xf32>
    %79 = math.exp %78 : vector<8x16xf32>
    %cst_32 = arith.constant dense<0.000000e+00> : vector<8xf32>
    %80 = vector.multi_reduction <add>, %79, %cst_32 [1] : vector<8x16xf32> to vector<8xf32>
    %81 = vector.shape_cast %80 : vector<8xf32> to vector<8x1xf32>
    %82 = tpu.reciprocal %81 {approx = true} : vector<8x1xf32> -> vector<8x1xf32>
    %83 = vector.broadcast %82 : vector<8x1xf32> to vector<8x16xf32>
    %84 = arith.mulf %79, %83 : vector<8x16xf32>
    %85 = vector.extract_strided_slice %18 {offsets = [0, 24], sizes = [16, 8], strides = [1, 1]} : vector<16x32xf32> to vector<16x8xf32>
    %cst_33 = arith.constant dense<0.000000e+00> : vector<8x8xf32>
    %86 = tpu.matmul %84, %85, %cst_33 {dimension_numbers = #tpu.dot_dimension_numbers<[1], [0], [0], [1], [0, 0, 1, 1], [], []>} : vector<8x16xf32>, vector<16x8xf32>, vector<8x8xf32> -> vector<8x8xf32>
    %87 = tpu.concatenate %35, %52, %69, %86 in 1 : vector<8x8xf32>, vector<8x8xf32>, vector<8x8xf32>, vector<8x8xf32> -> vector<8x32xf32>
    %88 = vector.extract_strided_slice %8 {offsets = [8, 0], sizes = [8, 32], strides = [1, 1]} : vector<16x32xf32> to vector<8x32xf32>
    %89 = vector.extract_strided_slice %14 {offsets = [16, 0], sizes = [16, 32], strides = [1, 1]} : vector<32x32xf32> to vector<16x32xf32>
    %90 = vector.extract_strided_slice %15 {offsets = [16, 0], sizes = [16, 32], strides = [1, 1]} : vector<32x32xf32> to vector<16x32xf32>
    %91 = vector.extract_strided_slice %88 {offsets = [0, 0], sizes = [8, 8], strides = [1, 1]} : vector<8x32xf32> to vector<8x8xf32>
    %92 = vector.extract_strided_slice %89 {offsets = [0, 0], sizes = [16, 8], strides = [1, 1]} : vector<16x32xf32> to vector<16x8xf32>
    %cst_34 = arith.constant dense<0.000000e+00> : vector<8x16xf32>
    %93 = tpu.matmul %91, %92, %cst_34 {dimension_numbers = #tpu.dot_dimension_numbers<[1], [1], [0], [0], [0, 0, 1, 0], [], []>} : vector<8x8xf32>, vector<16x8xf32>, vector<8x16xf32> -> vector<8x16xf32>
    %cst_35 = arith.constant 0.353553385 : f32
    %94 = vector.broadcast %cst_35 : f32 to vector<8x16xf32>
    %95 = arith.mulf %93, %94 : vector<8x16xf32>
    %cst_36 = arith.constant dense<0xFF800000> : vector<8xf32>
    %96 = vector.multi_reduction <maximumf>, %95, %cst_36 [1] : vector<8x16xf32> to vector<8xf32>
    %97 = vector.shape_cast %96 : vector<8xf32> to vector<8x1xf32>
    %98 = vector.broadcast %97 : vector<8x1xf32> to vector<8x16xf32>
    %99 = arith.subf %95, %98 : vector<8x16xf32>
    %100 = math.exp %99 : vector<8x16xf32>
    %cst_37 = arith.constant dense<0.000000e+00> : vector<8xf32>
    %101 = vector.multi_reduction <add>, %100, %cst_37 [1] : vector<8x16xf32> to vector<8xf32>
    %102 = vector.shape_cast %101 : vector<8xf32> to vector<8x1xf32>
    %103 = tpu.reciprocal %102 {approx = true} : vector<8x1xf32> -> vector<8x1xf32>
    %104 = vector.broadcast %103 : vector<8x1xf32> to vector<8x16xf32>
    %105 = arith.mulf %100, %104 : vector<8x16xf32>
    %106 = vector.extract_strided_slice %90 {offsets = [0, 0], sizes = [16, 8], strides = [1, 1]} : vector<16x32xf32> to vector<16x8xf32>
    %cst_38 = arith.constant dense<0.000000e+00> : vector<8x8xf32>
    %107 = tpu.matmul %105, %106, %cst_38 {dimension_numbers = #tpu.dot_dimension_numbers<[1], [0], [0], [1], [0, 0, 1, 1], [], []>} : vector<8x16xf32>, vector<16x8xf32>, vector<8x8xf32> -> vector<8x8xf32>
    %108 = vector.extract_strided_slice %88 {offsets = [0, 8], sizes = [8, 8], strides = [1, 1]} : vector<8x32xf32> to vector<8x8xf32>
    %109 = vector.extract_strided_slice %89 {offsets = [0, 8], sizes = [16, 8], strides = [1, 1]} : vector<16x32xf32> to vector<16x8xf32>
    %cst_39 = arith.constant dense<0.000000e+00> : vector<8x16xf32>
    %110 = tpu.matmul %108, %109, %cst_39 {dimension_numbers = #tpu.dot_dimension_numbers<[1], [1], [0], [0], [0, 0, 1, 0], [], []>} : vector<8x8xf32>, vector<16x8xf32>, vector<8x16xf32> -> vector<8x16xf32>
    %cst_40 = arith.constant 0.353553385 : f32
    %111 = vector.broadcast %cst_40 : f32 to vector<8x16xf32>
    %112 = arith.mulf %110, %111 : vector<8x16xf32>
    %cst_41 = arith.constant dense<0xFF800000> : vector<8xf32>
    %113 = vector.multi_reduction <maximumf>, %112, %cst_41 [1] : vector<8x16xf32> to vector<8xf32>
    %114 = vector.shape_cast %113 : vector<8xf32> to vector<8x1xf32>
    %115 = vector.broadcast %114 : vector<8x1xf32> to vector<8x16xf32>
    %116 = arith.subf %112, %115 : vector<8x16xf32>
    %117 = math.exp %116 : vector<8x16xf32>
    %cst_42 = arith.constant dense<0.000000e+00> : vector<8xf32>
    %118 = vector.multi_reduction <add>, %117, %cst_42 [1] : vector<8x16xf32> to vector<8xf32>
    %119 = vector.shape_cast %118 : vector<8xf32> to vector<8x1xf32>
    %120 = tpu.reciprocal %119 {approx = true} : vector<8x1xf32> -> vector<8x1xf32>
    %121 = vector.broadcast %120 : vector<8x1xf32> to vector<8x16xf32>
    %122 = arith.mulf %117, %121 : vector<8x16xf32>
    %123 = vector.extract_strided_slice %90 {offsets = [0, 8], sizes = [16, 8], strides = [1, 1]} : vector<16x32xf32> to vector<16x8xf32>
    %cst_43 = arith.constant dense<0.000000e+00> : vector<8x8xf32>
    %124 = tpu.matmul %122, %123, %cst_43 {dimension_numbers = #tpu.dot_dimension_numbers<[1], [0], [0], [1], [0, 0, 1, 1], [], []>} : vector<8x16xf32>, vector<16x8xf32>, vector<8x8xf32> -> vector<8x8xf32>
    %125 = vector.extract_strided_slice %88 {offsets = [0, 16], sizes = [8, 8], strides = [1, 1]} : vector<8x32xf32> to vector<8x8xf32>
    %126 = vector.extract_strided_slice %89 {offsets = [0, 16], sizes = [16, 8], strides = [1, 1]} : vector<16x32xf32> to vector<16x8xf32>
    %cst_44 = arith.constant dense<0.000000e+00> : vector<8x16xf32>
    %127 = tpu.matmul %125, %126, %cst_44 {dimension_numbers = #tpu.dot_dimension_numbers<[1], [1], [0], [0], [0, 0, 1, 0], [], []>} : vector<8x8xf32>, vector<16x8xf32>, vector<8x16xf32> -> vector<8x16xf32>
    %cst_45 = arith.constant 0.353553385 : f32
    %128 = vector.broadcast %cst_45 : f32 to vector<8x16xf32>
    %129 = arith.mulf %127, %128 : vector<8x16xf32>
    %cst_46 = arith.constant dense<0xFF800000> : vector<8xf32>
    %130 = vector.multi_reduction <maximumf>, %129, %cst_46 [1] : vector<8x16xf32> to vector<8xf32>
    %131 = vector.shape_cast %130 : vector<8xf32> to vector<8x1xf32>
    %132 = vector.broadcast %131 : vector<8x1xf32> to vector<8x16xf32>
    %133 = arith.subf %129, %132 : vector<8x16xf32>
    %134 = math.exp %133 : vector<8x16xf32>
    %cst_47 = arith.constant dense<0.000000e+00> : vector<8xf32>
    %135 = vector.multi_reduction <add>, %134, %cst_47 [1] : vector<8x16xf32> to vector<8xf32>
    %136 = vector.shape_cast %135 : vector<8xf32> to vector<8x1xf32>
    %137 = tpu.reciprocal %136 {approx = true} : vector<8x1xf32> -> vector<8x1xf32>
    %138 = vector.broadcast %137 : vector<8x1xf32> to vector<8x16xf32>
    %139 = arith.mulf %134, %138 : vector<8x16xf32>
    %140 = vector.extract_strided_slice %90 {offsets = [0, 16], sizes = [16, 8], strides = [1, 1]} : vector<16x32xf32> to vector<16x8xf32>
    %cst_48 = arith.constant dense<0.000000e+00> : vector<8x8xf32>
    %141 = tpu.matmul %139, %140, %cst_48 {dimension_numbers = #tpu.dot_dimension_numbers<[1], [0], [0], [1], [0, 0, 1, 1], [], []>} : vector<8x16xf32>, vector<16x8xf32>, vector<8x8xf32> -> vector<8x8xf32>
    %142 = vector.extract_strided_slice %88 {offsets = [0, 24], sizes = [8, 8], strides = [1, 1]} : vector<8x32xf32> to vector<8x8xf32>
    %143 = vector.extract_strided_slice %89 {offsets = [0, 24], sizes = [16, 8], strides = [1, 1]} : vector<16x32xf32> to vector<16x8xf32>
    %cst_49 = arith.constant dense<0.000000e+00> : vector<8x16xf32>
    %144 = tpu.matmul %142, %143, %cst_49 {dimension_numbers = #tpu.dot_dimension_numbers<[1], [1], [0], [0], [0, 0, 1, 0], [], []>} : vector<8x8xf32>, vector<16x8xf32>, vector<8x16xf32> -> vector<8x16xf32>
    %cst_50 = arith.constant 0.353553385 : f32
    %145 = vector.broadcast %cst_50 : f32 to vector<8x16xf32>
    %146 = arith.mulf %144, %145 : vector<8x16xf32>
    %cst_51 = arith.constant dense<0xFF800000> : vector<8xf32>
    %147 = vector.multi_reduction <maximumf>, %146, %cst_51 [1] : vector<8x16xf32> to vector<8xf32>
    %148 = vector.shape_cast %147 : vector<8xf32> to vector<8x1xf32>
    %149 = vector.broadcast %148 : vector<8x1xf32> to vector<8x16xf32>
    %150 = arith.subf %146, %149 : vector<8x16xf32>
    %151 = math.exp %150 : vector<8x16xf32>
    %cst_52 = arith.constant dense<0.000000e+00> : vector<8xf32>
    %152 = vector.multi_reduction <add>, %151, %cst_52 [1] : vector<8x16xf32> to vector<8xf32>
    %153 = vector.shape_cast %152 : vector<8xf32> to vector<8x1xf32>
    %154 = tpu.reciprocal %153 {approx = true} : vector<8x1xf32> -> vector<8x1xf32>
    %155 = vector.broadcast %154 : vector<8x1xf32> to vector<8x16xf32>
    %156 = arith.mulf %151, %155 : vector<8x16xf32>
    %157 = vector.extract_strided_slice %90 {offsets = [0, 24], sizes = [16, 8], strides = [1, 1]} : vector<16x32xf32> to vector<16x8xf32>
    %cst_53 = arith.constant dense<0.000000e+00> : vector<8x8xf32>
    %158 = tpu.matmul %156, %157, %cst_53 {dimension_numbers = #tpu.dot_dimension_numbers<[1], [0], [0], [1], [0, 0, 1, 1], [], []>} : vector<8x16xf32>, vector<16x8xf32>, vector<8x8xf32> -> vector<8x8xf32>
    %159 = tpu.concatenate %107, %124, %141, %158 in 1 : vector<8x8xf32>, vector<8x8xf32>, vector<8x8xf32>, vector<8x8xf32> -> vector<8x32xf32>
    %160 = tpu.concatenate %87, %159 in 0 : vector<8x32xf32>, vector<8x32xf32> -> vector<16x32xf32>
    %c0_54 = arith.constant 0 : index
    %c0_55 = arith.constant 0 : index
    %161 = vector.load %arg6[%c0_54, %c0_55] : memref<32x32xf32, #tpu.memory_space<vmem>>, vector<32x32xf32>
    %cst_56 = arith.constant dense<0.000000e+00> : vector<16x32xf32>
    %162 = tpu.matmul %160, %161, %cst_56 {dimension_numbers = #tpu.dot_dimension_numbers<[1], [0], [0], [1], [0, 0, 1, 1], [], []>} : vector<16x32xf32>, vector<32x32xf32>, vector<16x32xf32> -> vector<16x32xf32>
    %c0_57 = arith.constant 0 : index
    %c0_58 = arith.constant 0 : index
    %163 = vector.load %arg7[%c0_57, %c0_58] : memref<1x32xf32, #tpu.memory_space<vmem>>, vector<1x32xf32>
    %164 = vector.broadcast %163 : vector<1x32xf32> to vector<16x32xf32>
    %165 = arith.addf %162, %164 : vector<16x32xf32>
    %166 = arith.addf %165, %1 : vector<16x32xf32>
    %c0_59 = arith.constant 0 : index
    %c0_60 = arith.constant 0 : index
    %167 = vector.load %arg8[%c0_59, %c0_60] : memref<1x32xf32, #tpu.memory_space<vmem>>, vector<1x32xf32>
    %c0_61 = arith.constant 0 : index
    %c0_62 = arith.constant 0 : index
    %168 = vector.load %arg9[%c0_61, %c0_62] : memref<1x32xf32, #tpu.memory_space<vmem>>, vector<1x32xf32>
    %cst_63 = arith.constant dense<0.000000e+00> : vector<16xf32>
    %169 = vector.multi_reduction <add>, %166, %cst_63 [1] : vector<16x32xf32> to vector<16xf32>
    %170 = vector.shape_cast %169 : vector<16xf32> to vector<16x1xf32>
    %cst_64 = arith.constant 3.200000e+01 : f32
    %171 = vector.broadcast %cst_64 : f32 to vector<16x1xf32>
    %172 = arith.divf %170, %171 : vector<16x1xf32>
    %173 = vector.broadcast %172 : vector<16x1xf32> to vector<16x32xf32>
    %174 = arith.subf %166, %173 : vector<16x32xf32>
    %175 = arith.mulf %174, %174 : vector<16x32xf32>
    %cst_65 = arith.constant dense<0.000000e+00> : vector<16xf32>
    %176 = vector.multi_reduction <add>, %175, %cst_65 [1] : vector<16x32xf32> to vector<16xf32>
    %177 = vector.shape_cast %176 : vector<16xf32> to vector<16x1xf32>
    %cst_66 = arith.constant 3.200000e+01 : f32
    %178 = vector.broadcast %cst_66 : f32 to vector<16x1xf32>
    %179 = arith.divf %177, %178 : vector<16x1xf32>
    %180 = vector.broadcast %172 : vector<16x1xf32> to vector<16x32xf32>
    %181 = arith.subf %166, %180 : vector<16x32xf32>
    %cst_67 = arith.constant 9.99999996E-13 : f32
    %182 = vector.broadcast %cst_67 : f32 to vector<16x1xf32>
    %183 = arith.addf %179, %182 : vector<16x1xf32>
    %184 = math.rsqrt %183 : vector<16x1xf32>
    %185 = vector.broadcast %184 : vector<16x1xf32> to vector<16x32xf32>
    %186 = arith.mulf %181, %185 : vector<16x32xf32>
    %187 = vector.broadcast %167 : vector<1x32xf32> to vector<16x32xf32>
    %188 = arith.mulf %186, %187 : vector<16x32xf32>
    %189 = vector.broadcast %168 : vector<1x32xf32> to vector<16x32xf32>
    %190 = arith.addf %188, %189 : vector<16x32xf32>
    %c0_68 = arith.constant 0 : index
    %c0_69 = arith.constant 0 : index
    %191 = vector.load %arg10[%c0_68, %c0_69] : memref<32x64xf32, #tpu.memory_space<vmem>>, vector<32x64xf32>
    %cst_70 = arith.constant dense<0.000000e+00> : vector<16x64xf32>
    %192 = tpu.matmul %190, %191, %cst_70 {dimension_numbers = #tpu.dot_dimension_numbers<[1], [0], [0], [1], [0, 0, 1, 1], [], []>} : vector<16x32xf32>, vector<32x64xf32>, vector<16x64xf32> -> vector<16x64xf32>
    %c0_71 = arith.constant 0 : index
    %c0_72 = arith.constant 0 : index
    %193 = vector.load %arg11[%c0_71, %c0_72] : memref<1x64xf32, #tpu.memory_space<vmem>>, vector<1x64xf32>
    %194 = vector.broadcast %193 : vector<1x64xf32> to vector<16x64xf32>
    %195 = arith.addf %192, %194 : vector<16x64xf32>
    %cst_73 = arith.constant 5.000000e-01 : f32
    %196 = vector.broadcast %cst_73 : f32 to vector<16x64xf32>
    %197 = arith.mulf %195, %196 : vector<16x64xf32>
    %cst_74 = arith.constant 0.707106769 : f32
    %198 = vector.broadcast %cst_74 : f32 to vector<16x64xf32>
    %199 = arith.mulf %195, %198 : vector<16x64xf32>
    %200 = math.erf %199 : vector<16x64xf32>
    %cst_75 = arith.constant 1.000000e+00 : f32
    %201 = vector.broadcast %cst_75 : f32 to vector<16x64xf32>
    %202 = arith.addf %201, %200 : vector<16x64xf32>
    %203 = arith.mulf %197, %202 : vector<16x64xf32>
    %c0_76 = arith.constant 0 : index
    %c0_77 = arith.constant 0 : index
    %204 = vector.load %arg12[%c0_76, %c0_77] : memref<64x32xf32, #tpu.memory_space<vmem>>, vector<64x32xf32>
    %cst_78 = arith.constant dense<0.000000e+00> : vector<16x32xf32>
    %205 = tpu.matmul %203, %204, %cst_78 {dimension_numbers = #tpu.dot_dimension_numbers<[1], [0], [0], [1], [0, 0, 1, 1], [], []>} : vector<16x64xf32>, vector<64x32xf32>, vector<16x32xf32> -> vector<16x32xf32>
    %c0_79 = arith.constant 0 : index
    %c0_80 = arith.constant 0 : index
    %206 = vector.load %arg13[%c0_79, %c0_80] : memref<1x32xf32, #tpu.memory_space<vmem>>, vector<1x32xf32>
    %207 = vector.broadcast %206 : vector<1x32xf32> to vector<16x32xf32>
    %208 = arith.addf %205, %207 : vector<16x32xf32>
    %209 = arith.addf %208, %190 : vector<16x32xf32>
    %c0_81 = arith.constant 0 : index
    %c0_82 = arith.constant 0 : index
    %210 = vector.load %arg14[%c0_81, %c0_82] : memref<1x32xf32, #tpu.memory_space<vmem>>, vector<1x32xf32>
    %c0_83 = arith.constant 0 : index
    %c0_84 = arith.constant 0 : index
    %211 = vector.load %arg15[%c0_83, %c0_84] : memref<1x32xf32, #tpu.memory_space<vmem>>, vector<1x32xf32>
    %cst_85 = arith.constant dense<0.000000e+00> : vector<16xf32>
    %212 = vector.multi_reduction <add>, %209, %cst_85 [1] : vector<16x32xf32> to vector<16xf32>
    %213 = vector.shape_cast %212 : vector<16xf32> to vector<16x1xf32>
    %cst_86 = arith.constant 3.200000e+01 : f32
    %214 = vector.broadcast %cst_86 : f32 to vector<16x1xf32>
    %215 = arith.divf %213, %214 : vector<16x1xf32>
    %216 = vector.broadcast %215 : vector<16x1xf32> to vector<16x32xf32>
    %217 = arith.subf %209, %216 : vector<16x32xf32>
    %218 = arith.mulf %217, %217 : vector<16x32xf32>
    %cst_87 = arith.constant dense<0.000000e+00> : vector<16xf32>
    %219 = vector.multi_reduction <add>, %218, %cst_87 [1] : vector<16x32xf32> to vector<16xf32>
    %220 = vector.shape_cast %219 : vector<16xf32> to vector<16x1xf32>
    %cst_88 = arith.constant 3.200000e+01 : f32
    %221 = vector.broadcast %cst_88 : f32 to vector<16x1xf32>
    %222 = arith.divf %220, %221 : vector<16x1xf32>
    %223 = vector.broadcast %215 : vector<16x1xf32> to vector<16x32xf32>
    %224 = arith.subf %209, %223 : vector<16x32xf32>
    %cst_89 = arith.constant 9.99999996E-13 : f32
    %225 = vector.broadcast %cst_89 : f32 to vector<16x1xf32>
    %226 = arith.addf %222, %225 : vector<16x1xf32>
    %227 = math.rsqrt %226 : vector<16x1xf32>
    %228 = vector.broadcast %227 : vector<16x1xf32> to vector<16x32xf32>
    %229 = arith.mulf %224, %228 : vector<16x32xf32>
    %230 = vector.broadcast %210 : vector<1x32xf32> to vector<16x32xf32>
    %231 = arith.mulf %229, %230 : vector<16x32xf32>
    %232 = vector.broadcast %211 : vector<1x32xf32> to vector<16x32xf32>
    %233 = arith.addf %231, %232 : vector<16x32xf32>
    %234 = vector.shape_cast %233 : vector<16x32xf32> to vector<2x8x32xf32>
    %c0_90 = arith.constant 0 : index
    %c0_91 = arith.constant 0 : index
    %c0_92 = arith.constant 0 : index
    %235 = vector.load %arg16[%c0_90, %c0_91, %c0_92] : memref<2x8x32xf32, #tpu.memory_space<vmem>>, vector<2x8x32xf32>
    tpu.vector_store %arg16[%c0_90, %c0_91, %c0_92], %234 {strides = array<i32>} : memref<2x8x32xf32, #tpu.memory_space<vmem>>, vector<2x8x32xf32>,
    return
  }
}

</mosaic_0001>

<llo_original>
// kernel: tpu_custom_call.1
$region0: #{tpu_custom_call.1}
  #allocation0 [shape = 'u32[]', space=smem, size = 0x4, offset = 0x4, fixed_abs, tag = 'smem constant byte address 0x4 - core index']
  #allocation1 [shape = 'u32[144,128]{1,0:T(1,128)}', space=vmem, size = 0x12000, scoped, tag = 'internal scratch']
  %s0 = inlined_call_operand.hbm [shape: f32[2,8,32], index: 0, kind: input, shape index: {}]
  %s1 = inlined_call_operand.vmem [shape: f32[2,16,64], index: 1, kind: input, shape index: {}]
  %s2 = inlined_call_operand.hbm [shape: f32[32,32], index: 2, kind: input, shape index: {}]
  %s3 = inlined_call_operand.vmem [shape: f32[1,32], index: 3, kind: input, shape index: {}]
  %s4 = inlined_call_operand.vmem [shape: f32[64,64], index: 4, kind: input, shape index: {}]
  %s5 = inlined_call_operand.vmem [shape: f32[1,64], index: 5, kind: input, shape index: {}]
  %s6 = inlined_call_operand.hbm [shape: f32[32,32], index: 6, kind: input, shape index: {}]
  %s7 = inlined_call_operand.vmem [shape: f32[1,32], index: 7, kind: input, shape index: {}]
  %s8 = inlined_call_operand.vmem [shape: f32[1,32], index: 8, kind: input, shape index: {}]
  %s9 = inlined_call_operand.vmem [shape: f32[1,32], index: 9, kind: input, shape index: {}]
  %s10 = inlined_call_operand.hbm [shape: f32[32,64], index: 10, kind: input, shape index: {}]
  %s11 = inlined_call_operand.vmem [shape: f32[1,64], index: 11, kind: input, shape index: {}]
  %s12 = inlined_call_operand.vmem [shape: f32[64,32], index: 12, kind: input, shape index: {}]
  %s13 = inlined_call_operand.vmem [shape: f32[1,32], index: 13, kind: input, shape index: {}]
  %s14 = inlined_call_operand.vmem [shape: f32[1,32], index: 14, kind: input, shape index: {}]
  %s15 = inlined_call_operand.vmem [shape: f32[1,32], index: 15, kind: input, shape index: {}]
  %s16 = inlined_call_operand.hbm [shape: f32[2,8,32], index: 16, kind: output, shape index: {}]
  %s17 = sld [smem:[#allocation0]]
  $region90: #{tpu_custom_call.1} parent=0
    _
  %s19 = ssub.s32 1, %s17
  %s20 = scalar_select 0, %s19, %s17
  $region1: #{tpu_custom_call.1} parent=0
    #allocation2 [shape = 'u8[8192]{0}', space=vmem, size = 0x2000, scoped, tag = 'input window, operand 0, single buffered']
    #allocation3 [shape = 's32[1]{0}', space=sflag, size = 0x4, scoped, tag = 'scoped memory for tpu_custom_call.1']
    #allocation4 [shape = 's32[1]{0}', space=sflag, size = 0x4, scoped, tag = 'scoped memory for tpu_custom_call.1']
    #allocation5 [shape = 'u8[16384]{0}', space=vmem, size = 0x4000, scoped, tag = 'input window, operand 2, single buffered']
    #allocation6 [shape = 's32[1]{0}', space=sflag, size = 0x4, scoped, tag = 'scoped memory for tpu_custom_call.1']
    #allocation7 [shape = 'u8[16384]{0}', space=vmem, size = 0x4000, scoped, tag = 'input window, operand 6, single buffered']
    #allocation8 [shape = 'u8[16384]{0}', space=vmem, size = 0x4000, scoped, tag = 'input window, operand 10, single buffered']
    #allocation9 [shape = 's32[1]{0}', space=sflag, size = 0x4, scoped, tag = 'scoped memory for tpu_custom_call.1']
    #allocation10 [shape = 'u8[8192]{0}', space=vmem, size = 0x2000, scoped, tag = 'output window, operand 0, single buffered']
    %21 = vsyncpa [#allocation3], 0
    %22 = vsyncpa [#allocation6], 0
    %23 = vsyncpa [#allocation9], 0
    %24 = vsyncpa [#allocation4], 0
    // Predicated region
    $region2: #{tpu_custom_call.1} parent=1 // pred_check
      _
    $region3: #{tpu_custom_call.1} parent=1 // pred_check_branch
      %26 = sbr.rel (0) target = $region5
    $region4: #{tpu_custom_call.1} parent=1 // pred_region
      %s28 = ssub.s32 256, 256
      %29 = vsyncadd [#allocation3], %s28
      %s30 = sshll.u32 [#allocation2], 4
      %s31 = int_to_ptr.vmem [resolvable:$true] %s30
      %36 = dma.hbm_to_vmem [thread:$0]  %s0, 256, %s31, [#allocation3], 128, 128, 8
    $region5: #{tpu_custom_call.1} parent=1 // pred_fallthru
      _
    // Predicated region
    $region6: #{tpu_custom_call.1} parent=1 // pred_check
      _
    $region7: #{tpu_custom_call.1} parent=1 // pred_check_branch
      %38 = sbr.rel (0) target = $region9
    $region8: #{tpu_custom_call.1} parent=1 // pred_region
      _
    $region9: #{tpu_custom_call.1} parent=1 // pred_fallthru
      _
    // Predicated region
    $region10: #{tpu_custom_call.1} parent=1 // pred_check
      _
    $region11: #{tpu_custom_call.1} parent=1 // pred_check_branch
      %40 = sbr.rel (0) target = $region13
    $region12: #{tpu_custom_call.1} parent=1 // pred_region
      %s42 = ssub.s32 512, 512
      %43 = vsyncadd [#allocation6], %s42
      %s44 = sshll.u32 [#allocation5], 4
      %s45 = int_to_ptr.vmem [resolvable:$true] %s44
      %50 = dma.hbm_to_vmem [thread:$0]  %s2, 512, %s45, [#allocation6], 128, 128, 8
    $region13: #{tpu_custom_call.1} parent=1 // pred_fallthru
      _
    // Predicated region
    $region14: #{tpu_custom_call.1} parent=1 // pred_check
      _
    $region15: #{tpu_custom_call.1} parent=1 // pred_check_branch
      %52 = sbr.rel (0) target = $region17
    $region16: #{tpu_custom_call.1} parent=1 // pred_region
      _
    $region17: #{tpu_custom_call.1} parent=1 // pred_fallthru
      _
    // Predicated region
    $region18: #{tpu_custom_call.1} parent=1 // pred_check
      _
    $region19: #{tpu_custom_call.1} parent=1 // pred_check_branch
      %54 = sbr.rel (0) target = $region21
    $region20: #{tpu_custom_call.1} parent=1 // pred_region
      _
    $region21: #{tpu_custom_call.1} parent=1 // pred_fallthru
      _
    // Predicated region
    $region22: #{tpu_custom_call.1} parent=1 // pred_check
      _
    $region23: #{tpu_custom_call.1} parent=1 // pred_check_branch
      %56 = sbr.rel (0) target = $region25
    $region24: #{tpu_custom_call.1} parent=1 // pred_region
      _
    $region25: #{tpu_custom_call.1} parent=1 // pred_fallthru
      _
    // Predicated region
    $region26: #{tpu_custom_call.1} parent=1 // pred_check
      _
    $region27: #{tpu_custom_call.1} parent=1 // pred_check_branch
      %58 = sbr.rel (0) target = $region29
    $region28: #{tpu_custom_call.1} parent=1 // pred_region
      %s60 = ssub.s32 512, 512
      %61 = vsyncadd [#allocation6], %s60
      %s62 = sshll.u32 [#allocation7], 4
      %s63 = int_to_ptr.vmem [resolvable:$true] %s62
      %68 = dma.hbm_to_vmem [thread:$0]  %s6, 512, %s63, [#allocation6], 128, 128, 8
    $region29: #{tpu_custom_call.1} parent=1 // pred_fallthru
      _
    // Predicated region
    $region30: #{tpu_custom_call.1} parent=1 // pred_check
      _
    $region31: #{tpu_custom_call.1} parent=1 // pred_check_branch
      %70 = sbr.rel (0) target = $region33
    $region32: #{tpu_custom_call.1} parent=1 // pred_region
      _
    $region33: #{tpu_custom_call.1} parent=1 // pred_fallthru
      _
    // Predicated region
    $region34: #{tpu_custom_call.1} parent=1 // pred_check
      _
    $region35: #{tpu_custom_call.1} parent=1 // pred_check_branch
      %72 = sbr.rel (0) target = $region37
    $region36: #{tpu_custom_call.1} parent=1 // pred_region
      _
    $region37: #{tpu_custom_call.1} parent=1 // pred_fallthru
      _
    // Predicated region
    $region38: #{tpu_custom_call.1} parent=1 // pred_check
      _
    $region39: #{tpu_custom_call.1} parent=1 // pred_check_branch
      %74 = sbr.rel (0) target = $region41
    $region40: #{tpu_custom_call.1} parent=1 // pred_region
      _
    $region41: #{tpu_custom_call.1} parent=1 // pred_fallthru
      _
    // Predicated region
    $region42: #{tpu_custom_call.1} parent=1 // pred_check
      _
    $region43: #{tpu_custom_call.1} parent=1 // pred_check_branch
      %76 = sbr.rel (0) target = $region45
    $region44: #{tpu_custom_call.1} parent=1 // pred_region
      %s78 = ssub.s32 512, 512
      %79 = vsyncadd [#allocation9], %s78
      %s80 = sshll.u32 [#allocation8], 4
      %s81 = int_to_ptr.vmem [resolvable:$true] %s80
      %86 = dma.hbm_to_vmem [thread:$0]  %s10, 512, %s81, [#allocation9], 128, 128, 8
    $region45: #{tpu_custom_call.1} parent=1 // pred_fallthru
      _
    // Predicated region
    $region46: #{tpu_custom_call.1} parent=1 // pred_check
      _
    $region47: #{tpu_custom_call.1} parent=1 // pred_check_branch
      %88 = sbr.rel (0) target = $region49
    $region48: #{tpu_custom_call.1} parent=1 // pred_region
      _
    $region49: #{tpu_custom_call.1} parent=1 // pred_fallthru
      _
    // Predicated region
    $region50: #{tpu_custom_call.1} parent=1 // pred_check
      _
    $region51: #{tpu_custom_call.1} parent=1 // pred_check_branch
      %90 = sbr.rel (0) target = $region53
    $region52: #{tpu_custom_call.1} parent=1 // pred_region
      _
    $region53: #{tpu_custom_call.1} parent=1 // pred_fallthru
      _
    // Predicated region
    $region54: #{tpu_custom_call.1} parent=1 // pred_check
      _
    $region55: #{tpu_custom_call.1} parent=1 // pred_check_branch
      %92 = sbr.rel (0) target = $region57
    $region56: #{tpu_custom_call.1} parent=1 // pred_region
      _
    $region57: #{tpu_custom_call.1} parent=1 // pred_fallthru
      _
    // Predicated region
    $region58: #{tpu_custom_call.1} parent=1 // pred_check
      _
    $region59: #{tpu_custom_call.1} parent=1 // pred_check_branch
      %94 = sbr.rel (0) target = $region61
    $region60: #{tpu_custom_call.1} parent=1 // pred_region
      _
    $region61: #{tpu_custom_call.1} parent=1 // pred_fallthru
      _
    // Predicated region
    $region62: #{tpu_custom_call.1} parent=1 // pred_check
      _
    $region63: #{tpu_custom_call.1} parent=1 // pred_check_branch
      %96 = sbr.rel (0) target = $region65
    $region64: #{tpu_custom_call.1} parent=1 // pred_region
      _
    $region65: #{tpu_custom_call.1} parent=1 // pred_fallthru
      _
    // Predicated region
    $region66: #{tpu_custom_call.1} parent=1 // pred_check
      _
    $region67: #{tpu_custom_call.1} parent=1 // pred_check_branch
      %98 = sbr.rel (0) target = $region69
    $region68: #{tpu_custom_call.1} parent=1 // pred_region
      %99 = dma.done [#allocation3], 256
    $region69: #{tpu_custom_call.1} parent=1 // pred_fallthru
      _
    // Predicated region
    $region70: #{tpu_custom_call.1} parent=1 // pred_check
      _
    $region71: #{tpu_custom_call.1} parent=1 // pred_check_branch
      %101 = sbr.rel (0) target = $region73
    $region72: #{tpu_custom_call.1} parent=1 // pred_region
      %102 = dma.done [#allocation6], 512
    $region73: #{tpu_custom_call.1} parent=1 // pred_fallthru
      _
    // Predicated region
    $region74: #{tpu_custom_call.1} parent=1 // pred_check
      _
    $region75: #{tpu_custom_call.1} parent=1 // pred_check_branch
      %104 = sbr.rel (0) target = $region77
    $region76: #{tpu_custom_call.1} parent=1 // pred_region
      %105 = dma.done [#allocation6], 512
    $region77: #{tpu_custom_call.1} parent=1 // pred_fallthru
      _
    // Predicated region
    $region78: #{tpu_custom_call.1} parent=1 // pred_check
      _
    $region79: #{tpu_custom_call.1} parent=1 // pred_check_branch
      %107 = sbr.rel (0) target = $region81
    $region80: #{tpu_custom_call.1} parent=1 // pred_region
      %108 = dma.done [#allocation9], 512
    $region81: #{tpu_custom_call.1} parent=1 // pred_fallthru
      _
    %v109 = vld [vmem:[#allocation2] sm:$0xff]
    %v110 = vld [vmem:[#allocation2 + $0x8] sm:$0xff]
    %v111 = vld [vmem:[%s1] sm:$0xff]
    %v112 = vld [vmem:[%s1 + $0x8] sm:$0xff]
    %v113 = vld [vmem:[%s1 + $0x10] sm:$0xff]
    %v114 = vld [vmem:[%s1 + $0x18] sm:$0xff]
    %v115 = vld [vmem:[#allocation5] sm:$0xff]
    %v116 = vld [vmem:[#allocation5 + $0x8] sm:$0xff]
    %v117 = vld [vmem:[#allocation5 + $0x10] sm:$0xff]
    %v118 = vld [vmem:[#allocation5 + $0x18] sm:$0xff]
    %v119 = vld [vmem:[%s3] sm:$0x1]
    %v121 = vlaneseq
    %v122 = vshrl.u32 %v121, 7
    %v123 = vsub.s32 0, %v122
    %v124 = vrot.slane %v119, %v123
    %vm126 = vcmask 261120
    %v128 = vsel %vm126, %v109, 0
    %v131 = vsel %vm126, %v110, 0
    %133 = vmatprep.subr.mxu0 0.0
    %134 = vmatpush1.msra.mxu0 0.0
    %135 = vmatprep.subr.mxu0 0.0
    %136 = vmatpush1.msra.mxu0 0.0
    %137 = vmatprep.subr.mxu0 0.0
    %138 = vmatpush1.msra.mxu0 0.0
    %139 = vmatprep.subr.mxu0 0.0
    %140 = vmatpush1.msra.mxu0 0.0
    %141 = vmatprep.subr.mxu0 0.0
    %142 = vmatpush1.msra.mxu0 0.0
    %143 = vmatprep.subr.mxu0 0.0
    %144 = vmatpush1.msra.mxu0 0.0
    %145 = vmatprep.subr.mxu0 0.0
    %146 = vmatpush1.msra.mxu0 0.0
    %147 = vmatprep.subr.mxu0 0.0
    %148 = vmatpush1.msra.mxu0 0.0
    %149 = vmatprep.subr.mxu0 0.0
    %150 = vmatpush1.msra.mxu0 0.0
    %151 = vmatprep.subr.mxu0 0.0
    %152 = vmatpush1.msra.mxu0 0.0
    %153 = vmatprep.subr.mxu0 0.0
    %154 = vmatpush1.msra.mxu0 0.0
    %155 = vmatprep.subr.mxu0 0.0
    %156 = vmatpush1.msra.mxu0 0.0
    %157 = vmatprep.subr.mxu0 0.0
    %158 = vmatpush1.msra.mxu0 %v118
    %159 = vmatprep.subr.mxu0 0.0
    %160 = vmatpush1.msra.mxu0 %v117
    %161 = vmatprep.subr.mxu0 0.0
    %162 = vmatpush1.msra.mxu0 %v116
    %163 = vmatprep.subr.mxu0 0.0
    %164 = vmatpush1.msra.mxu0 %v115
    %165 = vmatprep.subr.mxu0 0.0
    %166 = vmatpush2.msra.mxu0 0.0
    %167 = vmatprep.subr.mxu0 0.0
    %168 = vmatpush2.msra.mxu0 0.0
    %169 = vmatprep.subr.mxu0 0.0
    %170 = vmatpush2.msra.mxu0 0.0
    %171 = vmatprep.subr.mxu0 0.0
    %172 = vmatpush2.msra.mxu0 0.0
    %173 = vmatprep.subr.mxu0 0.0
    %174 = vmatpush2.msra.mxu0 0.0
    %175 = vmatprep.subr.mxu0 0.0
    %176 = vmatpush2.msra.mxu0 0.0
    %177 = vmatprep.subr.mxu0 0.0
    %178 = vmatpush2.msra.mxu0 0.0
    %179 = vmatprep.subr.mxu0 0.0
    %180 = vmatpush2.msra.mxu0 0.0
    %181 = vmatprep.subr.mxu0 0.0
    %182 = vmatpush2.msra.mxu0 0.0
    %183 = vmatprep.subr.mxu0 0.0
    %184 = vmatpush2.msra.mxu0 0.0
    %185 = vmatprep.subr.mxu0 0.0
    %186 = vmatpush2.msra.mxu0 0.0
    %187 = vmatprep.subr.mxu0 0.0
    %188 = vmatpush2.msra.mxu0 0.0
    %189 = vmatprep.subr.mxu0 0.0
    %190 = vmatpush2.msra.mxu0 0.0
    %191 = vmatprep.subr.mxu0 0.0
    %192 = vmatpush2.msra.mxu0 0.0
    %193 = vmatprep.subr.mxu0 0.0
    %194 = vmatpush2.msra.mxu0 0.0
    %195 = vmatprep.subr.mxu0 0.0
    %196 = vmatpush2.msra.mxu0 0.0
    %197 = vmatprep.mubr.f32.mxu0 0.0
    %198 = vmatmul.mubr.f32.gmra.mxu0 %v128
    %v199 = vpop.f32.mrf.mxu0
    %v200 = vadd.f32 %v124, %v199
    %v201 = vpop.f32.mrf.mxu0
    %202 = vmatprep.mubr.f32.mxu0 0.0
    %203 = vmatmul.mubr.f32.gmra.mxu0 %v131
    %v204 = vpop.f32.mrf.mxu0
    %v205 = vadd.f32 %v124, %v204
    %v206 = vpop.f32.mrf.mxu0
    %207 = vdwg.mxu0
    %v208 = vld [vmem:[%s4] sm:$0xff]
    %v209 = vld [vmem:[%s4 + $0x8] sm:$0xff]
    %v210 = vld [vmem:[%s4 + $0x10] sm:$0xff]
    %v211 = vld [vmem:[%s4 + $0x18] sm:$0xff]
    %v212 = vld [vmem:[%s4 + $0x20] sm:$0xff]
    %v213 = vld [vmem:[%s4 + $0x28] sm:$0xff]
    %v214 = vld [vmem:[%s4 + $0x30] sm:$0xff]
    %v215 = vld [vmem:[%s4 + $0x38] sm:$0xff]
    %v216 = vld [vmem:[%s5] sm:$0x1]
    %v218 = vlaneseq
    %v219 = vshrl.u32 %v218, 7
    %v220 = vsub.s32 0, %v219
    %v221 = vrot.slane %v216, %v220
    %vm223 = vcmask 523264
    %v225 = vsel %vm223, %v111, 0
    %v228 = vsel %vm223, %v112, 0
    %v231 = vsel %vm223, %v113, 0
    %v234 = vsel %vm223, %v114, 0
    %236 = vmatprep.subr.mxu0 0.0
    %237 = vmatpush1.msra.mxu0 0.0
    %238 = vmatprep.subr.mxu0 0.0
    %239 = vmatpush1.msra.mxu0 0.0
    %240 = vmatprep.subr.mxu0 0.0
    %241 = vmatpush1.msra.mxu0 0.0
    %242 = vmatprep.subr.mxu0 0.0
    %243 = vmatpush1.msra.mxu0 0.0
    %244 = vmatprep.subr.mxu0 0.0
    %245 = vmatpush1.msra.mxu0 0.0
    %246 = vmatprep.subr.mxu0 0.0
    %247 = vmatpush1.msra.mxu0 0.0
    %248 = vmatprep.subr.mxu0 0.0
    %249 = vmatpush1.msra.mxu0 0.0
    %250 = vmatprep.subr.mxu0 0.0
    %251 = vmatpush1.msra.mxu0 0.0
    %252 = vmatprep.subr.mxu0 0.0
    %253 = vmatpush1.msra.mxu0 %v215
    %254 = vmatprep.subr.mxu0 0.0
    %255 = vmatpush1.msra.mxu0 %v214
    %256 = vmatprep.subr.mxu0 0.0
    %257 = vmatpush1.msra.mxu0 %v213
    %258 = vmatprep.subr.mxu0 0.0
    %259 = vmatpush1.msra.mxu0 %v212
    %260 = vmatprep.subr.mxu0 0.0
    %261 = vmatpush1.msra.mxu0 %v211
    %262 = vmatprep.subr.mxu0 0.0
    %263 = vmatpush1.msra.mxu0 %v210
    %264 = vmatprep.subr.mxu0 0.0
    %265 = vmatpush1.msra.mxu0 %v209
    %266 = vmatprep.subr.mxu0 0.0
    %267 = vmatpush1.msra.mxu0 %v208
    %268 = vmatprep.subr.mxu0 0.0
    %269 = vmatpush2.msra.mxu0 0.0
    %270 = vmatprep.subr.mxu0 0.0
    %271 = vmatpush2.msra.mxu0 0.0
    %272 = vmatprep.subr.mxu0 0.0
    %273 = vmatpush2.msra.mxu0 0.0
    %274 = vmatprep.subr.mxu0 0.0
    %275 = vmatpush2.msra.mxu0 0.0
    %276 = vmatprep.subr.mxu0 0.0
    %277 = vmatpush2.msra.mxu0 0.0
    %278 = vmatprep.subr.mxu0 0.0
    %279 = vmatpush2.msra.mxu0 0.0
    %280 = vmatprep.subr.mxu0 0.0
    %281 = vmatpush2.msra.mxu0 0.0
    %282 = vmatprep.subr.mxu0 0.0
    %283 = vmatpush2.msra.mxu0 0.0
    %284 = vmatprep.subr.mxu0 0.0
    %285 = vmatpush2.msra.mxu0 0.0
    %286 = vmatprep.subr.mxu0 0.0
    %287 = vmatpush2.msra.mxu0 0.0
    %288 = vmatprep.subr.mxu0 0.0
    %289 = vmatpush2.msra.mxu0 0.0
    %290 = vmatprep.subr.mxu0 0.0
    %291 = vmatpush2.msra.mxu0 0.0
    %292 = vmatprep.subr.mxu0 0.0
    %293 = vmatpush2.msra.mxu0 0.0
    %294 = vmatprep.subr.mxu0 0.0
    %295 = vmatpush2.msra.mxu0 0.0
    %296 = vmatprep.subr.mxu0 0.0
    %297 = vmatpush2.msra.mxu0 0.0
    %298 = vmatprep.subr.mxu0 0.0
    %299 = vmatpush2.msra.mxu0 0.0
    %300 = vmatprep.mubr.f32.mxu0 0.0
    %301 = vmatmul.mubr.f32.gmra.mxu0 %v225
    %v302 = vpop.f32.mrf.mxu0
    %v303 = vadd.f32 %v221, %v302
    %v304 = vpop.f32.mrf.mxu0
    %305 = vmatprep.mubr.f32.mxu0 0.0
    %306 = vmatmul.mubr.f32.gmra.mxu0 %v228
    %v307 = vpop.f32.mrf.mxu0
    %v308 = vadd.f32 %v221, %v307
    %v309 = vpop.f32.mrf.mxu0
    %310 = vmatprep.mubr.f32.mxu0 0.0
    %311 = vmatmul.mubr.f32.gmra.mxu0 %v231
    %v312 = vpop.f32.mrf.mxu0
    %v313 = vadd.f32 %v221, %v312
    %v314 = vpop.f32.mrf.mxu0
    %315 = vmatprep.mubr.f32.mxu0 0.0
    %316 = vmatmul.mubr.f32.gmra.mxu0 %v234
    %v317 = vpop.f32.mrf.mxu0
    %v318 = vadd.f32 %v221, %v317
    %v319 = vpop.f32.mrf.mxu0
    %320 = vdwg.mxu0
    %vm321 = vcmask 64512
    %v323 = vsel %vm321, %v200, 0
    %v326 = vsel %vm321, %v303, 0
    %v329 = vsel %vm321, %v308, 0
    %331 = vmatprep.subr.mxu0 0.0
    %332 = vmatpush1.xpose.msra.mxu0 0.0
    %333 = vmatprep.subr.mxu0 0.0
    %334 = vmatpush1.xpose.msra.mxu0 0.0
    %335 = vmatprep.subr.mxu0 0.0
    %336 = vmatpush1.xpose.msra.mxu0 0.0
    %337 = vmatprep.subr.mxu0 0.0
    %338 = vmatpush1.xpose.msra.mxu0 0.0
    %339 = vmatprep.subr.mxu0 0.0
    %340 = vmatpush1.xpose.msra.mxu0 0.0
    %341 = vmatprep.subr.mxu0 0.0
    %342 = vmatpush1.xpose.msra.mxu0 0.0
    %343 = vmatprep.subr.mxu0 0.0
    %344 = vmatpush1.xpose.msra.mxu0 0.0
    %345 = vmatprep.subr.mxu0 0.0
    %346 = vmatpush1.xpose.msra.mxu0 0.0
    %347 = vmatprep.subr.mxu0 0.0
    %348 = vmatpush1.xpose.msra.mxu0 0.0
    %349 = vmatprep.subr.mxu0 0.0
    %350 = vmatpush1.xpose.msra.mxu0 0.0
    %351 = vmatprep.subr.mxu0 0.0
    %352 = vmatpush1.xpose.msra.mxu0 0.0
    %353 = vmatprep.subr.mxu0 0.0
    %354 = vmatpush1.xpose.msra.mxu0 0.0
    %355 = vmatprep.subr.mxu0 0.0
    %356 = vmatpush1.xpose.msra.mxu0 0.0
    %357 = vmatprep.subr.mxu0 0.0
    %358 = vmatpush1.xpose.msra.mxu0 0.0
    %359 = vmatprep.subr.mxu0 0.0
    %360 = vmatpush1.xpose.msra.mxu0 %v329
    %361 = vmatprep.subr.mxu0 0.0
    %362 = vmatpush1.xpose.msra.mxu0 %v326
    %363 = vmatprep.subr.mxu0 0.0
    %364 = vmatpush2.xpose.msra.mxu0 0.0
    %365 = vmatprep.subr.mxu0 0.0
    %366 = vmatpush2.xpose.msra.mxu0 0.0
    %367 = vmatprep.subr.mxu0 0.0
    %368 = vmatpush2.xpose.msra.mxu0 0.0
    %369 = vmatprep.subr.mxu0 0.0
    %370 = vmatpush2.xpose.msra.mxu0 0.0
    %371 = vmatprep.subr.mxu0 0.0
    %372 = vmatpush2.xpose.msra.mxu0 0.0
    %373 = vmatprep.subr.mxu0 0.0
    %374 = vmatpush2.xpose.msra.mxu0 0.0
    %375 = vmatprep.subr.mxu0 0.0
    %376 = vmatpush2.xpose.msra.mxu0 0.0
    %377 = vmatprep.subr.mxu0 0.0
    %378 = vmatpush2.xpose.msra.mxu0 0.0
    %379 = vmatprep.subr.mxu0 0.0
    %380 = vmatpush2.xpose.msra.mxu0 0.0
    %381 = vmatprep.subr.mxu0 0.0
    %382 = vmatpush2.xpose.msra.mxu0 0.0
    %383 = vmatprep.subr.mxu0 0.0
    %384 = vmatpush2.xpose.msra.mxu0 0.0
    %385 = vmatprep.subr.mxu0 0.0
    %386 = vmatpush2.xpose.msra.mxu0 0.0
    %387 = vmatprep.subr.mxu0 0.0
    %388 = vmatpush2.xpose.msra.mxu0 0.0
    %389 = vmatprep.subr.mxu0 0.0
    %390 = vmatpush2.xpose.msra.mxu0 0.0
    %391 = vmatprep.subr.mxu0 0.0
    %392 = vmatpush2.xpose.msra.mxu0 0.0
    %393 = vmatprep.subr.mxu0 0.0
    %394 = vmatpush2.xpose.msra.mxu0 0.0
    %395 = vmatprep.mubr.f32.mxu0 0.0
    %396 = vmatmul.mubr.f32.gmra.mxu0 %v323
    %v397 = vpop.f32.mrf.mxu0
    %v398 = vadd.f32 0.0, %v397
    %v399 = vpop.f32.mrf.mxu0
    %400 = vdwg.mxu0
    %v401 = vmul.f32 %v398, 0.35355338
    %vm402 = vcmask 130048
    %v403 = vsel %vm402, %v401, -inf
    %404 = vmax.xlane.f32.xlu0 %v403
    %v405 = vpop.xlane.xlu0 %404
    %v406 = vsub.f32 %v401, %v405
    %v407 = vmul.f32 %v406, 1.442695
    %v408 = vpow.pop %v407
    %v409 = vsel %vm402, %v408, 0.0
    %410 = vadd.xlane.f32.xlu0 %v409
    %v411 = vpop.xlane.xlu0 %410
    %v412 = vrcp.pop %v411
    %v413 = vmul.f32 %v408, %v412
    %414 = vrot.lane.b32.xlu0 %v303, 96
    %v415 = vpop.permute.xlu0 %414
    %416 = vrot.lane.b32.xlu0 %v308, 96
    %v417 = vpop.permute.xlu0 %416
    %v421 = vsel %vm402, %v413, 0
    %423 = vmatprep.subr.mxu0 0.0
    %424 = vmatpush1.msra.mxu0 0.0
    %425 = vmatprep.subr.mxu0 0.0
    %426 = vmatpush1.msra.mxu0 0.0
    %427 = vmatprep.subr.mxu0 0.0
    %428 = vmatpush1.msra.mxu0 0.0
    %429 = vmatprep.subr.mxu0 0.0
    %430 = vmatpush1.msra.mxu0 0.0
    %431 = vmatprep.subr.mxu0 0.0
    %432 = vmatpush1.msra.mxu0 0.0
    %433 = vmatprep.subr.mxu0 0.0
    %434 = vmatpush1.msra.mxu0 0.0
    %435 = vmatprep.subr.mxu0 0.0
    %436 = vmatpush1.msra.mxu0 0.0
    %437 = vmatprep.subr.mxu0 0.0
    %438 = vmatpush1.msra.mxu0 0.0
    %439 = vmatprep.subr.mxu0 0.0
    %440 = vmatpush1.msra.mxu0 0.0
    %441 = vmatprep.subr.mxu0 0.0
    %442 = vmatpush1.msra.mxu0 0.0
    %443 = vmatprep.subr.mxu0 0.0
    %444 = vmatpush1.msra.mxu0 0.0
    %445 = vmatprep.subr.mxu0 0.0
    %446 = vmatpush1.msra.mxu0 0.0
    %447 = vmatprep.subr.mxu0 0.0
    %448 = vmatpush1.msra.mxu0 0.0
    %449 = vmatprep.subr.mxu0 0.0
    %450 = vmatpush1.msra.mxu0 0.0
    %451 = vmatprep.subr.mxu0 0.0
    %452 = vmatpush1.msra.mxu0 %v417
    %453 = vmatprep.subr.mxu0 0.0
    %454 = vmatpush1.msra.mxu0 %v415
    %455 = vmatprep.subr.mxu0 0.0
    %456 = vmatpush2.msra.mxu0 0.0
    %457 = vmatprep.subr.mxu0 0.0
    %458 = vmatpush2.msra.mxu0 0.0
    %459 = vmatprep.subr.mxu0 0.0
    %460 = vmatpush2.msra.mxu0 0.0
    %461 = vmatprep.subr.mxu0 0.0
    %462 = vmatpush2.msra.mxu0 0.0
    %463 = vmatprep.subr.mxu0 0.0
    %464 = vmatpush2.msra.mxu0 0.0
    %465 = vmatprep.subr.mxu0 0.0
    %466 = vmatpush2.msra.mxu0 0.0
    %467 = vmatprep.subr.mxu0 0.0
    %468 = vmatpush2.msra.mxu0 0.0
    %469 = vmatprep.subr.mxu0 0.0
    %470 = vmatpush2.msra.mxu0 0.0
    %471 = vmatprep.subr.mxu0 0.0
    %472 = vmatpush2.msra.mxu0 0.0
    %473 = vmatprep.subr.mxu0 0.0
    %474 = vmatpush2.msra.mxu0 0.0
    %475 = vmatprep.subr.mxu0 0.0
    %476 = vmatpush2.msra.mxu0 0.0
    %477 = vmatprep.subr.mxu0 0.0
    %478 = vmatpush2.msra.mxu0 0.0
    %479 = vmatprep.subr.mxu0 0.0
    %480 = vmatpush2.msra.mxu0 0.0
    %481 = vmatprep.subr.mxu0 0.0
    %482 = vmatpush2.msra.mxu0 0.0
    %483 = vmatprep.subr.mxu0 0.0
    %484 = vmatpush2.msra.mxu0 0.0
    %485 = vmatprep.subr.mxu0 0.0
    %486 = vmatpush2.msra.mxu0 0.0
    %487 = vmatprep.mubr.f32.mxu0 0.0
    %488 = vmatmul.mubr.f32.gmra.mxu0 %v421
    %v489 = vpop.f32.mrf.mxu0
    %v490 = vadd.f32 0.0, %v489
    %v491 = vpop.f32.mrf.mxu0
    %492 = vdwg.mxu0
    %493 = vrot.lane.b32.xlu0 %v200, 120
    %v494 = vpop.permute.xlu0 %493
    %495 = vrot.lane.b32.xlu0 %v303, 120
    %v496 = vpop.permute.xlu0 %495
    %497 = vrot.lane.b32.xlu0 %v308, 120
    %v498 = vpop.permute.xlu0 %497
    %v499 = vsel %vm321, %v494, 0
    %v501 = vsel %vm321, %v496, 0
    %v503 = vsel %vm321, %v498, 0
    %505 = vmatprep.subr.mxu0 0.0
    %506 = vmatpush1.xpose.msra.mxu0 0.0
    %507 = vmatprep.subr.mxu0 0.0
    %508 = vmatpush1.xpose.msra.mxu0 0.0
    %509 = vmatprep.subr.mxu0 0.0
    %510 = vmatpush1.xpose.msra.mxu0 0.0
    %511 = vmatprep.subr.mxu0 0.0
    %512 = vmatpush1.xpose.msra.mxu0 0.0
    %513 = vmatprep.subr.mxu0 0.0
    %514 = vmatpush1.xpose.msra.mxu0 0.0
    %515 = vmatprep.subr.mxu0 0.0
    %516 = vmatpush1.xpose.msra.mxu0 0.0
    %517 = vmatprep.subr.mxu0 0.0
    %518 = vmatpush1.xpose.msra.mxu0 0.0
    %519 = vmatprep.subr.mxu0 0.0
    %520 = vmatpush1.xpose.msra.mxu0 0.0
    %521 = vmatprep.subr.mxu0 0.0
    %522 = vmatpush1.xpose.msra.mxu0 0.0
    %523 = vmatprep.subr.mxu0 0.0
    %524 = vmatpush1.xpose.msra.mxu0 0.0
    %525 = vmatprep.subr.mxu0 0.0
    %526 = vmatpush1.xpose.msra.mxu0 0.0
    %527 = vmatprep.subr.mxu0 0.0
    %528 = vmatpush1.xpose.msra.mxu0 0.0
    %529 = vmatprep.subr.mxu0 0.0
    %530 = vmatpush1.xpose.msra.mxu0 0.0
    %531 = vmatprep.subr.mxu0 0.0
    %532 = vmatpush1.xpose.msra.mxu0 0.0
    %533 = vmatprep.subr.mxu0 0.0
    %534 = vmatpush1.xpose.msra.mxu0 %v503
    %535 = vmatprep.subr.mxu0 0.0
    %536 = vmatpush1.xpose.msra.mxu0 %v501
    %537 = vmatprep.subr.mxu0 0.0
    %538 = vmatpush2.xpose.msra.mxu0 0.0
    %539 = vmatprep.subr.mxu0 0.0
    %540 = vmatpush2.xpose.msra.mxu0 0.0
    %541 = vmatprep.subr.mxu0 0.0
    %542 = vmatpush2.xpose.msra.mxu0 0.0
    %543 = vmatprep.subr.mxu0 0.0
    %544 = vmatpush2.xpose.msra.mxu0 0.0
    %545 = vmatprep.subr.mxu0 0.0
    %546 = vmatpush2.xpose.msra.mxu0 0.0
    %547 = vmatprep.subr.mxu0 0.0
    %548 = vmatpush2.xpose.msra.mxu0 0.0
    %549 = vmatprep.subr.mxu0 0.0
    %550 = vmatpush2.xpose.msra.mxu0 0.0
    %551 = vmatprep.subr.mxu0 0.0
    %552 = vmatpush2.xpose.msra.mxu0 0.0
    %553 = vmatprep.subr.mxu0 0.0
    %554 = vmatpush2.xpose.msra.mxu0 0.0
    %555 = vmatprep.subr.mxu0 0.0
    %556 = vmatpush2.xpose.msra.mxu0 0.0
    %557 = vmatprep.subr.mxu0 0.0
    %558 = vmatpush2.xpose.msra.mxu0 0.0
    %559 = vmatprep.subr.mxu0 0.0
    %560 = vmatpush2.xpose.msra.mxu0 0.0
    %561 = vmatprep.subr.mxu0 0.0
    %562 = vmatpush2.xpose.msra.mxu0 0.0
    %563 = vmatprep.subr.mxu0 0.0
    %564 = vmatpush2.xpose.msra.mxu0 0.0
    %565 = vmatprep.subr.mxu0 0.0
    %566 = vmatpush2.xpose.msra.mxu0 0.0
    %567 = vmatprep.subr.mxu0 0.0
    %568 = vmatpush2.xpose.msra.mxu0 0.0
    %569 = vmatprep.mubr.f32.mxu0 0.0
    %570 = vmatmul.mubr.f32.gmra.mxu0 %v499
    %v571 = vpop.f32.mrf.mxu0
    %v572 = vadd.f32 0.0, %v571
    %v573 = vpop.f32.mrf.mxu0
    %574 = vdwg.mxu0
    %v575 = vmul.f32 %v572, 0.35355338
    %v576 = vsel %vm402, %v575, -inf
    %577 = vmax.xlane.f32.xlu0 %v576
    %v578 = vpop.xlane.xlu0 %577
    %v579 = vsub.f32 %v575, %v578
    %v580 = vmul.f32 %v579, 1.442695
    %v581 = vpow.pop %v580
    %v582 = vsel %vm402, %v581, 0.0
    %583 = vadd.xlane.f32.xlu0 %v582
    %v584 = vpop.xlane.xlu0 %583
    %v585 = vrcp.pop %v584
    %v586 = vmul.f32 %v581, %v585
    %587 = vrot.lane.b32.xlu0 %v303, 88
    %v588 = vpop.permute.xlu0 %587
    %589 = vrot.lane.b32.xlu0 %v308, 88
    %v590 = vpop.permute.xlu0 %589
    %v594 = vsel %vm402, %v586, 0
    %596 = vmatprep.subr.mxu0 0.0
    %597 = vmatpush1.msra.mxu0 0.0
    %598 = vmatprep.subr.mxu0 0.0
    %599 = vmatpush1.msra.mxu0 0.0
    %600 = vmatprep.subr.mxu0 0.0
    %601 = vmatpush1.msra.mxu0 0.0
    %602 = vmatprep.subr.mxu0 0.0
    %603 = vmatpush1.msra.mxu0 0.0
    %604 = vmatprep.subr.mxu0 0.0
    %605 = vmatpush1.msra.mxu0 0.0
    %606 = vmatprep.subr.mxu0 0.0
    %607 = vmatpush1.msra.mxu0 0.0
    %608 = vmatprep.subr.mxu0 0.0
    %609 = vmatpush1.msra.mxu0 0.0
    %610 = vmatprep.subr.mxu0 0.0
    %611 = vmatpush1.msra.mxu0 0.0
    %612 = vmatprep.subr.mxu0 0.0
    %613 = vmatpush1.msra.mxu0 0.0
    %614 = vmatprep.subr.mxu0 0.0
    %615 = vmatpush1.msra.mxu0 0.0
    %616 = vmatprep.subr.mxu0 0.0
    %617 = vmatpush1.msra.mxu0 0.0
    %618 = vmatprep.subr.mxu0 0.0
    %619 = vmatpush1.msra.mxu0 0.0
    %620 = vmatprep.subr.mxu0 0.0
    %621 = vmatpush1.msra.mxu0 0.0
    %622 = vmatprep.subr.mxu0 0.0
    %623 = vmatpush1.msra.mxu0 0.0
    %624 = vmatprep.subr.mxu0 0.0
    %625 = vmatpush1.msra.mxu0 %v590
    %626 = vmatprep.subr.mxu0 0.0
    %627 = vmatpush1.msra.mxu0 %v588
    %628 = vmatprep.subr.mxu0 0.0
    %629 = vmatpush2.msra.mxu0 0.0
    %630 = vmatprep.subr.mxu0 0.0
    %631 = vmatpush2.msra.mxu0 0.0
    %632 = vmatprep.subr.mxu0 0.0
    %633 = vmatpush2.msra.mxu0 0.0
    %634 = vmatprep.subr.mxu0 0.0
    %635 = vmatpush2.msra.mxu0 0.0
    %636 = vmatprep.subr.mxu0 0.0
    %637 = vmatpush2.msra.mxu0 0.0
    %638 = vmatprep.subr.mxu0 0.0
    %639 = vmatpush2.msra.mxu0 0.0
    %640 = vmatprep.subr.mxu0 0.0
    %641 = vmatpush2.msra.mxu0 0.0
    %642 = vmatprep.subr.mxu0 0.0
    %643 = vmatpush2.msra.mxu0 0.0
    %644 = vmatprep.subr.mxu0 0.0
    %645 = vmatpush2.msra.mxu0 0.0
    %646 = vmatprep.subr.mxu0 0.0
    %647 = vmatpush2.msra.mxu0 0.0
    %648 = vmatprep.subr.mxu0 0.0
    %649 = vmatpush2.msra.mxu0 0.0
    %650 = vmatprep.subr.mxu0 0.0
    %651 = vmatpush2.msra.mxu0 0.0
    %652 = vmatprep.subr.mxu0 0.0
    %653 = vmatpush2.msra.mxu0 0.0
    %654 = vmatprep.subr.mxu0 0.0
    %655 = vmatpush2.msra.mxu0 0.0
    %656 = vmatprep.subr.mxu0 0.0
    %657 = vmatpush2.msra.mxu0 0.0
    %658 = vmatprep.subr.mxu0 0.0
    %659 = vmatpush2.msra.mxu0 0.0
    %660 = vmatprep.mubr.f32.mxu0 0.0
    %661 = vmatmul.mubr.f32.gmra.mxu0 %v594
    %v662 = vpop.f32.mrf.mxu0
    %v663 = vadd.f32 0.0, %v662
    %v664 = vpop.f32.mrf.mxu0
    %665 = vdwg.mxu0
    %666 = vrot.lane.b32.xlu0 %v200, 112
    %v667 = vpop.permute.xlu0 %666
    %668 = vrot.lane.b32.xlu0 %v303, 112
    %v669 = vpop.permute.xlu0 %668
    %670 = vrot.lane.b32.xlu0 %v308, 112
    %v671 = vpop.permute.xlu0 %670
    %v672 = vsel %vm321, %v667, 0
    %v674 = vsel %vm321, %v669, 0
    %v676 = vsel %vm321, %v671, 0
    %678 = vmatprep.subr.mxu0 0.0
    %679 = vmatpush1.xpose.msra.mxu0 0.0
    %680 = vmatprep.subr.mxu0 0.0
    %681 = vmatpush1.xpose.msra.mxu0 0.0
    %682 = vmatprep.subr.mxu0 0.0
    %683 = vmatpush1.xpose.msra.mxu0 0.0
    %684 = vmatprep.subr.mxu0 0.0
    %685 = vmatpush1.xpose.msra.mxu0 0.0
    %686 = vmatprep.subr.mxu0 0.0
    %687 = vmatpush1.xpose.msra.mxu0 0.0
    %688 = vmatprep.subr.mxu0 0.0
    %689 = vmatpush1.xpose.msra.mxu0 0.0
    %690 = vmatprep.subr.mxu0 0.0
    %691 = vmatpush1.xpose.msra.mxu0 0.0
    %692 = vmatprep.subr.mxu0 0.0
    %693 = vmatpush1.xpose.msra.mxu0 0.0
    %694 = vmatprep.subr.mxu0 0.0
    %695 = vmatpush1.xpose.msra.mxu0 0.0
    %696 = vmatprep.subr.mxu0 0.0
    %697 = vmatpush1.xpose.msra.mxu0 0.0
    %698 = vmatprep.subr.mxu0 0.0
    %699 = vmatpush1.xpose.msra.mxu0 0.0
    %700 = vmatprep.subr.mxu0 0.0
    %701 = vmatpush1.xpose.msra.mxu0 0.0
    %702 = vmatprep.subr.mxu0 0.0
    %703 = vmatpush1.xpose.msra.mxu0 0.0
    %704 = vmatprep.subr.mxu0 0.0
    %705 = vmatpush1.xpose.msra.mxu0 0.0
    %706 = vmatprep.subr.mxu0 0.0
    %707 = vmatpush1.xpose.msra.mxu0 %v676
    %708 = vmatprep.subr.mxu0 0.0
    %709 = vmatpush1.xpose.msra.mxu0 %v674
    %710 = vmatprep.subr.mxu0 0.0
    %711 = vmatpush2.xpose.msra.mxu0 0.0
    %712 = vmatprep.subr.mxu0 0.0
    %713 = vmatpush2.xpose.msra.mxu0 0.0
    %714 = vmatprep.subr.mxu0 0.0
    %715 = vmatpush2.xpose.msra.mxu0 0.0
    %716 = vmatprep.subr.mxu0 0.0
    %717 = vmatpush2.xpose.msra.mxu0 0.0
    %718 = vmatprep.subr.mxu0 0.0
    %719 = vmatpush2.xpose.msra.mxu0 0.0
    %720 = vmatprep.subr.mxu0 0.0
    %721 = vmatpush2.xpose.msra.mxu0 0.0
    %722 = vmatprep.subr.mxu0 0.0
    %723 = vmatpush2.xpose.msra.mxu0 0.0
    %724 = vmatprep.subr.mxu0 0.0
    %725 = vmatpush2.xpose.msra.mxu0 0.0
    %726 = vmatprep.subr.mxu0 0.0
    %727 = vmatpush2.xpose.msra.mxu0 0.0
    %728 = vmatprep.subr.mxu0 0.0
    %729 = vmatpush2.xpose.msra.mxu0 0.0
    %730 = vmatprep.subr.mxu0 0.0
    %731 = vmatpush2.xpose.msra.mxu0 0.0
    %732 = vmatprep.subr.mxu0 0.0
    %733 = vmatpush2.xpose.msra.mxu0 0.0
    %734 = vmatprep.subr.mxu0 0.0
    %735 = vmatpush2.xpose.msra.mxu0 0.0
    %736 = vmatprep.subr.mxu0 0.0
    %737 = vmatpush2.xpose.msra.mxu0 0.0
    %738 = vmatprep.subr.mxu0 0.0
    %739 = vmatpush2.xpose.msra.mxu0 0.0
    %740 = vmatprep.subr.mxu0 0.0
    %741 = vmatpush2.xpose.msra.mxu0 0.0
    %742 = vmatprep.mubr.f32.mxu0 0.0
    %743 = vmatmul.mubr.f32.gmra.mxu0 %v672
    %v744 = vpop.f32.mrf.mxu0
    %v745 = vadd.f32 0.0, %v744
    %v746 = vpop.f32.mrf.mxu0
    %747 = vdwg.mxu0
    %v748 = vmul.f32 %v745, 0.35355338
    %v749 = vsel %vm402, %v748, -inf
    %750 = vmax.xlane.f32.xlu0 %v749
    %v751 = vpop.xlane.xlu0 %750
    %v752 = vsub.f32 %v748, %v751
    %v753 = vmul.f32 %v752, 1.442695
    %v754 = vpow.pop %v753
    %v755 = vsel %vm402, %v754, 0.0
    %756 = vadd.xlane.f32.xlu0 %v755
    %v757 = vpop.xlane.xlu0 %756
    %v758 = vrcp.pop %v757
    %v759 = vmul.f32 %v754, %v758
    %760 = vrot.lane.b32.xlu0 %v303, 80
    %v761 = vpop.permute.xlu0 %760
    %762 = vrot.lane.b32.xlu0 %v308, 80
    %v763 = vpop.permute.xlu0 %762
    %v767 = vsel %vm402, %v759, 0
    %769 = vmatprep.subr.mxu0 0.0
    %770 = vmatpush1.msra.mxu0 0.0
    %771 = vmatprep.subr.mxu0 0.0
    %772 = vmatpush1.msra.mxu0 0.0
    %773 = vmatprep.subr.mxu0 0.0
    %774 = vmatpush1.msra.mxu0 0.0
    %775 = vmatprep.subr.mxu0 0.0
    %776 = vmatpush1.msra.mxu0 0.0
    %777 = vmatprep.subr.mxu0 0.0
    %778 = vmatpush1.msra.mxu0 0.0
    %779 = vmatprep.subr.mxu0 0.0
    %780 = vmatpush1.msra.mxu0 0.0
    %781 = vmatprep.subr.mxu0 0.0
    %782 = vmatpush1.msra.mxu0 0.0
    %783 = vmatprep.subr.mxu0 0.0
    %784 = vmatpush1.msra.mxu0 0.0
    %785 = vmatprep.subr.mxu0 0.0
    %786 = vmatpush1.msra.mxu0 0.0
    %787 = vmatprep.subr.mxu0 0.0
    %788 = vmatpush1.msra.mxu0 0.0
    %789 = vmatprep.subr.mxu0 0.0
    %790 = vmatpush1.msra.mxu0 0.0
    %791 = vmatprep.subr.mxu0 0.0
    %792 = vmatpush1.msra.mxu0 0.0
    %793 = vmatprep.subr.mxu0 0.0
    %794 = vmatpush1.msra.mxu0 0.0
    %795 = vmatprep.subr.mxu0 0.0
    %796 = vmatpush1.msra.mxu0 0.0
    %797 = vmatprep.subr.mxu0 0.0
    %798 = vmatpush1.msra.mxu0 %v763
    %799 = vmatprep.subr.mxu0 0.0
    %800 = vmatpush1.msra.mxu0 %v761
    %801 = vmatprep.subr.mxu0 0.0
    %802 = vmatpush2.msra.mxu0 0.0
    %803 = vmatprep.subr.mxu0 0.0
    %804 = vmatpush2.msra.mxu0 0.0
    %805 = vmatprep.subr.mxu0 0.0
    %806 = vmatpush2.msra.mxu0 0.0
    %807 = vmatprep.subr.mxu0 0.0
    %808 = vmatpush2.msra.mxu0 0.0
    %809 = vmatprep.subr.mxu0 0.0
    %810 = vmatpush2.msra.mxu0 0.0
    %811 = vmatprep.subr.mxu0 0.0
    %812 = vmatpush2.msra.mxu0 0.0
    %813 = vmatprep.subr.mxu0 0.0
    %814 = vmatpush2.msra.mxu0 0.0
    %815 = vmatprep.subr.mxu0 0.0
    %816 = vmatpush2.msra.mxu0 0.0
    %817 = vmatprep.subr.mxu0 0.0
    %818 = vmatpush2.msra.mxu0 0.0
    %819 = vmatprep.subr.mxu0 0.0
    %820 = vmatpush2.msra.mxu0 0.0
    %821 = vmatprep.subr.mxu0 0.0
    %822 = vmatpush2.msra.mxu0 0.0
    %823 = vmatprep.subr.mxu0 0.0
    %824 = vmatpush2.msra.mxu0 0.0
    %825 = vmatprep.subr.mxu0 0.0
    %826 = vmatpush2.msra.mxu0 0.0
    %827 = vmatprep.subr.mxu0 0.0
    %828 = vmatpush2.msra.mxu0 0.0
    %829 = vmatprep.subr.mxu0 0.0
    %830 = vmatpush2.msra.mxu0 0.0
    %831 = vmatprep.subr.mxu0 0.0
    %832 = vmatpush2.msra.mxu0 0.0
    %833 = vmatprep.mubr.f32.mxu0 0.0
    %834 = vmatmul.mubr.f32.gmra.mxu0 %v767
    %v835 = vpop.f32.mrf.mxu0
    %v836 = vadd.f32 0.0, %v835
    %v837 = vpop.f32.mrf.mxu0
    %838 = vdwg.mxu0
    %839 = vrot.lane.b32.xlu0 %v200, 104
    %v840 = vpop.permute.xlu0 %839
    %841 = vrot.lane.b32.xlu0 %v303, 104
    %v842 = vpop.permute.xlu0 %841
    %843 = vrot.lane.b32.xlu0 %v308, 104
    %v844 = vpop.permute.xlu0 %843
    %v845 = vsel %vm321, %v840, 0
    %v847 = vsel %vm321, %v842, 0
    %v849 = vsel %vm321, %v844, 0
    %851 = vmatprep.subr.mxu0 0.0
    %852 = vmatpush1.xpose.msra.mxu0 0.0
    %853 = vmatprep.subr.mxu0 0.0
    %854 = vmatpush1.xpose.msra.mxu0 0.0
    %855 = vmatprep.subr.mxu0 0.0
    %856 = vmatpush1.xpose.msra.mxu0 0.0
    %857 = vmatprep.subr.mxu0 0.0
    %858 = vmatpush1.xpose.msra.mxu0 0.0
    %859 = vmatprep.subr.mxu0 0.0
    %860 = vmatpush1.xpose.msra.mxu0 0.0
    %861 = vmatprep.subr.mxu0 0.0
    %862 = vmatpush1.xpose.msra.mxu0 0.0
    %863 = vmatprep.subr.mxu0 0.0
    %864 = vmatpush1.xpose.msra.mxu0 0.0
    %865 = vmatprep.subr.mxu0 0.0
    %866 = vmatpush1.xpose.msra.mxu0 0.0
    %867 = vmatprep.subr.mxu0 0.0
    %868 = vmatpush1.xpose.msra.mxu0 0.0
    %869 = vmatprep.subr.mxu0 0.0
    %870 = vmatpush1.xpose.msra.mxu0 0.0
    %871 = vmatprep.subr.mxu0 0.0
    %872 = vmatpush1.xpose.msra.mxu0 0.0
    %873 = vmatprep.subr.mxu0 0.0
    %874 = vmatpush1.xpose.msra.mxu0 0.0
    %875 = vmatprep.subr.mxu0 0.0
    %876 = vmatpush1.xpose.msra.mxu0 0.0
    %877 = vmatprep.subr.mxu0 0.0
    %878 = vmatpush1.xpose.msra.mxu0 0.0
    %879 = vmatprep.subr.mxu0 0.0
    %880 = vmatpush1.xpose.msra.mxu0 %v849
    %881 = vmatprep.subr.mxu0 0.0
    %882 = vmatpush1.xpose.msra.mxu0 %v847
    %883 = vmatprep.subr.mxu0 0.0
    %884 = vmatpush2.xpose.msra.mxu0 0.0
    %885 = vmatprep.subr.mxu0 0.0
    %886 = vmatpush2.xpose.msra.mxu0 0.0
    %887 = vmatprep.subr.mxu0 0.0
    %888 = vmatpush2.xpose.msra.mxu0 0.0
    %889 = vmatprep.subr.mxu0 0.0
    %890 = vmatpush2.xpose.msra.mxu0 0.0
    %891 = vmatprep.subr.mxu0 0.0
    %892 = vmatpush2.xpose.msra.mxu0 0.0
    %893 = vmatprep.subr.mxu0 0.0
    %894 = vmatpush2.xpose.msra.mxu0 0.0
    %895 = vmatprep.subr.mxu0 0.0
    %896 = vmatpush2.xpose.msra.mxu0 0.0
    %897 = vmatprep.subr.mxu0 0.0
    %898 = vmatpush2.xpose.msra.mxu0 0.0
    %899 = vmatprep.subr.mxu0 0.0
    %900 = vmatpush2.xpose.msra.mxu0 0.0
    %901 = vmatprep.subr.mxu0 0.0
    %902 = vmatpush2.xpose.msra.mxu0 0.0
    %903 = vmatprep.subr.mxu0 0.0
    %904 = vmatpush2.xpose.msra.mxu0 0.0
    %905 = vmatprep.subr.mxu0 0.0
    %906 = vmatpush2.xpose.msra.mxu0 0.0
    %907 = vmatprep.subr.mxu0 0.0
    %908 = vmatpush2.xpose.msra.mxu0 0.0
    %909 = vmatprep.subr.mxu0 0.0
    %910 = vmatpush2.xpose.msra.mxu0 0.0
    %911 = vmatprep.subr.mxu0 0.0
    %912 = vmatpush2.xpose.msra.mxu0 0.0
    %913 = vmatprep.subr.mxu0 0.0
    %914 = vmatpush2.xpose.msra.mxu0 0.0
    %915 = vmatprep.mubr.f32.mxu0 0.0
    %916 = vmatmul.mubr.f32.gmra.mxu0 %v845
    %v917 = vpop.f32.mrf.mxu0
    %v918 = vadd.f32 0.0, %v917
    %v919 = vpop.f32.mrf.mxu0
    %920 = vdwg.mxu0
    %v921 = vmul.f32 %v918, 0.35355338
    %v922 = vsel %vm402, %v921, -inf
    %923 = vmax.xlane.f32.xlu0 %v922
    %v924 = vpop.xlane.xlu0 %923
    %v925 = vsub.f32 %v921, %v924
    %v926 = vmul.f32 %v925, 1.442695
    %v927 = vpow.pop %v926
    %v928 = vsel %vm402, %v927, 0.0
    %929 = vadd.xlane.f32.xlu0 %v928
    %v930 = vpop.xlane.xlu0 %929
    %v931 = vrcp.pop %v930
    %v932 = vmul.f32 %v927, %v931
    %933 = vrot.lane.b32.xlu0 %v303, 72
    %v934 = vpop.permute.xlu0 %933
    %935 = vrot.lane.b32.xlu0 %v308, 72
    %v936 = vpop.permute.xlu0 %935
    %v940 = vsel %vm402, %v932, 0
    %942 = vmatprep.subr.mxu0 0.0
    %943 = vmatpush1.msra.mxu0 0.0
    %944 = vmatprep.subr.mxu0 0.0
    %945 = vmatpush1.msra.mxu0 0.0
    %946 = vmatprep.subr.mxu0 0.0
    %947 = vmatpush1.msra.mxu0 0.0
    %948 = vmatprep.subr.mxu0 0.0
    %949 = vmatpush1.msra.mxu0 0.0
    %950 = vmatprep.subr.mxu0 0.0
    %951 = vmatpush1.msra.mxu0 0.0
    %952 = vmatprep.subr.mxu0 0.0
    %953 = vmatpush1.msra.mxu0 0.0
    %954 = vmatprep.subr.mxu0 0.0
    %955 = vmatpush1.msra.mxu0 0.0
    %956 = vmatprep.subr.mxu0 0.0
    %957 = vmatpush1.msra.mxu0 0.0
    %958 = vmatprep.subr.mxu0 0.0
    %959 = vmatpush1.msra.mxu0 0.0
    %960 = vmatprep.subr.mxu0 0.0
    %961 = vmatpush1.msra.mxu0 0.0
    %962 = vmatprep.subr.mxu0 0.0
    %963 = vmatpush1.msra.mxu0 0.0
    %964 = vmatprep.subr.mxu0 0.0
    %965 = vmatpush1.msra.mxu0 0.0
    %966 = vmatprep.subr.mxu0 0.0
    %967 = vmatpush1.msra.mxu0 0.0
    %968 = vmatprep.subr.mxu0 0.0
    %969 = vmatpush1.msra.mxu0 0.0
    %970 = vmatprep.subr.mxu0 0.0
    %971 = vmatpush1.msra.mxu0 %v936
    %972 = vmatprep.subr.mxu0 0.0
    %973 = vmatpush1.msra.mxu0 %v934
    %974 = vmatprep.subr.mxu0 0.0
    %975 = vmatpush2.msra.mxu0 0.0
    %976 = vmatprep.subr.mxu0 0.0
    %977 = vmatpush2.msra.mxu0 0.0
    %978 = vmatprep.subr.mxu0 0.0
    %979 = vmatpush2.msra.mxu0 0.0
    %980 = vmatprep.subr.mxu0 0.0
    %981 = vmatpush2.msra.mxu0 0.0
    %982 = vmatprep.subr.mxu0 0.0
    %983 = vmatpush2.msra.mxu0 0.0
    %984 = vmatprep.subr.mxu0 0.0
    %985 = vmatpush2.msra.mxu0 0.0
    %986 = vmatprep.subr.mxu0 0.0
    %987 = vmatpush2.msra.mxu0 0.0
    %988 = vmatprep.subr.mxu0 0.0
    %989 = vmatpush2.msra.mxu0 0.0
    %990 = vmatprep.subr.mxu0 0.0
    %991 = vmatpush2.msra.mxu0 0.0
    %992 = vmatprep.subr.mxu0 0.0
    %993 = vmatpush2.msra.mxu0 0.0
    %994 = vmatprep.subr.mxu0 0.0
    %995 = vmatpush2.msra.mxu0 0.0
    %996 = vmatprep.subr.mxu0 0.0
    %997 = vmatpush2.msra.mxu0 0.0
    %998 = vmatprep.subr.mxu0 0.0
    %999 = vmatpush2.msra.mxu0 0.0
    %1000 = vmatprep.subr.mxu0 0.0
    %1001 = vmatpush2.msra.mxu0 0.0
    %1002 = vmatprep.subr.mxu0 0.0
    %1003 = vmatpush2.msra.mxu0 0.0
    %1004 = vmatprep.subr.mxu0 0.0
    %1005 = vmatpush2.msra.mxu0 0.0
    %1006 = vmatprep.mubr.f32.mxu0 0.0
    %1007 = vmatmul.mubr.f32.gmra.mxu0 %v940
    %v1008 = vpop.f32.mrf.mxu0
    %v1009 = vadd.f32 0.0, %v1008
    %v1010 = vpop.f32.mrf.mxu0
    %1011 = vdwg.mxu0
    %1013 = vrot.lane.b32.xlu0 %v663, 8
    %v1014 = vpop.permute.xlu0 %1013
    %1017 = vrot.lane.b32.xlu0 %v836, 16
    %v1018 = vpop.permute.xlu0 %1017
    %1021 = vrot.lane.b32.xlu0 %v1009, 24
    %v1022 = vpop.permute.xlu0 %1021
    %v1024 = vsel %vm321, %v490, %v1014
    %v1025 = vsel %vm402, %v1024, %v1018
    %vm1026 = vcmask 195584
    %v1027 = vsel %vm1026, %v1025, %v1022
    %v1029 = vsel %vm321, %v205, 0
    %v1032 = vsel %vm321, %v313, 0
    %v1035 = vsel %vm321, %v318, 0
    %1037 = vmatprep.subr.mxu0 0.0
    %1038 = vmatpush1.xpose.msra.mxu0 0.0
    %1039 = vmatprep.subr.mxu0 0.0
    %1040 = vmatpush1.xpose.msra.mxu0 0.0
    %1041 = vmatprep.subr.mxu0 0.0
    %1042 = vmatpush1.xpose.msra.mxu0 0.0
    %1043 = vmatprep.subr.mxu0 0.0
    %1044 = vmatpush1.xpose.msra.mxu0 0.0
    %1045 = vmatprep.subr.mxu0 0.0
    %1046 = vmatpush1.xpose.msra.mxu0 0.0
    %1047 = vmatprep.subr.mxu0 0.0
    %1048 = vmatpush1.xpose.msra.mxu0 0.0
    %1049 = vmatprep.subr.mxu0 0.0
    %1050 = vmatpush1.xpose.msra.mxu0 0.0
    %1051 = vmatprep.subr.mxu0 0.0
    %1052 = vmatpush1.xpose.msra.mxu0 0.0
    %1053 = vmatprep.subr.mxu0 0.0
    %1054 = vmatpush1.xpose.msra.mxu0 0.0
    %1055 = vmatprep.subr.mxu0 0.0
    %1056 = vmatpush1.xpose.msra.mxu0 0.0
    %1057 = vmatprep.subr.mxu0 0.0
    %1058 = vmatpush1.xpose.msra.mxu0 0.0
    %1059 = vmatprep.subr.mxu0 0.0
    %1060 = vmatpush1.xpose.msra.mxu0 0.0
    %1061 = vmatprep.subr.mxu0 0.0
    %1062 = vmatpush1.xpose.msra.mxu0 0.0
    %1063 = vmatprep.subr.mxu0 0.0
    %1064 = vmatpush1.xpose.msra.mxu0 0.0
    %1065 = vmatprep.subr.mxu0 0.0
    %1066 = vmatpush1.xpose.msra.mxu0 %v1035
    %1067 = vmatprep.subr.mxu0 0.0
    %1068 = vmatpush1.xpose.msra.mxu0 %v1032
    %1069 = vmatprep.subr.mxu0 0.0
    %1070 = vmatpush2.xpose.msra.mxu0 0.0
    %1071 = vmatprep.subr.mxu0 0.0
    %1072 = vmatpush2.xpose.msra.mxu0 0.0
    %1073 = vmatprep.subr.mxu0 0.0
    %1074 = vmatpush2.xpose.msra.mxu0 0.0
    %1075 = vmatprep.subr.mxu0 0.0
    %1076 = vmatpush2.xpose.msra.mxu0 0.0
    %1077 = vmatprep.subr.mxu0 0.0
    %1078 = vmatpush2.xpose.msra.mxu0 0.0
    %1079 = vmatprep.subr.mxu0 0.0
    %1080 = vmatpush2.xpose.msra.mxu0 0.0
    %1081 = vmatprep.subr.mxu0 0.0
    %1082 = vmatpush2.xpose.msra.mxu0 0.0
    %1083 = vmatprep.subr.mxu0 0.0
    %1084 = vmatpush2.xpose.msra.mxu0 0.0
    %1085 = vmatprep.subr.mxu0 0.0
    %1086 = vmatpush2.xpose.msra.mxu0 0.0
    %1087 = vmatprep.subr.mxu0 0.0
    %1088 = vmatpush2.xpose.msra.mxu0 0.0
    %1089 = vmatprep.subr.mxu0 0.0
    %1090 = vmatpush2.xpose.msra.mxu0 0.0
    %1091 = vmatprep.subr.mxu0 0.0
    %1092 = vmatpush2.xpose.msra.mxu0 0.0
    %1093 = vmatprep.subr.mxu0 0.0
    %1094 = vmatpush2.xpose.msra.mxu0 0.0
    %1095 = vmatprep.subr.mxu0 0.0
    %1096 = vmatpush2.xpose.msra.mxu0 0.0
    %1097 = vmatprep.subr.mxu0 0.0
    %1098 = vmatpush2.xpose.msra.mxu0 0.0
    %1099 = vmatprep.subr.mxu0 0.0
    %1100 = vmatpush2.xpose.msra.mxu0 0.0
    %1101 = vmatprep.mubr.f32.mxu0 0.0
    %1102 = vmatmul.mubr.f32.gmra.mxu0 %v1029
    %v1103 = vpop.f32.mrf.mxu0
    %v1104 = vadd.f32 0.0, %v1103
    %v1105 = vpop.f32.mrf.mxu0
    %1106 = vdwg.mxu0
    %v1107 = vmul.f32 %v1104, 0.35355338
    %v1108 = vsel %vm402, %v1107, -inf
    %1109 = vmax.xlane.f32.xlu0 %v1108
    %v1110 = vpop.xlane.xlu0 %1109
    %v1111 = vsub.f32 %v1107, %v1110
    %v1112 = vmul.f32 %v1111, 1.442695
    %v1113 = vpow.pop %v1112
    %v1114 = vsel %vm402, %v1113, 0.0
    %1115 = vadd.xlane.f32.xlu0 %v1114
    %v1116 = vpop.xlane.xlu0 %1115
    %v1117 = vrcp.pop %v1116
    %v1118 = vmul.f32 %v1113, %v1117
    %1119 = vrot.lane.b32.xlu0 %v313, 96
    %v1120 = vpop.permute.xlu0 %1119
    %1121 = vrot.lane.b32.xlu0 %v318, 96
    %v1122 = vpop.permute.xlu0 %1121
    %v1126 = vsel %vm402, %v1118, 0
    %1128 = vmatprep.subr.mxu0 0.0
    %1129 = vmatpush1.msra.mxu0 0.0
    %1130 = vmatprep.subr.mxu0 0.0
    %1131 = vmatpush1.msra.mxu0 0.0
    %1132 = vmatprep.subr.mxu0 0.0
    %1133 = vmatpush1.msra.mxu0 0.0
    %1134 = vmatprep.subr.mxu0 0.0
    %1135 = vmatpush1.msra.mxu0 0.0
    %1136 = vmatprep.subr.mxu0 0.0
    %1137 = vmatpush1.msra.mxu0 0.0
    %1138 = vmatprep.subr.mxu0 0.0
    %1139 = vmatpush1.msra.mxu0 0.0
    %1140 = vmatprep.subr.mxu0 0.0
    %1141 = vmatpush1.msra.mxu0 0.0
    %1142 = vmatprep.subr.mxu0 0.0
    %1143 = vmatpush1.msra.mxu0 0.0
    %1144 = vmatprep.subr.mxu0 0.0
    %1145 = vmatpush1.msra.mxu0 0.0
    %1146 = vmatprep.subr.mxu0 0.0
    %1147 = vmatpush1.msra.mxu0 0.0
    %1148 = vmatprep.subr.mxu0 0.0
    %1149 = vmatpush1.msra.mxu0 0.0
    %1150 = vmatprep.subr.mxu0 0.0
    %1151 = vmatpush1.msra.mxu0 0.0
    %1152 = vmatprep.subr.mxu0 0.0
    %1153 = vmatpush1.msra.mxu0 0.0
    %1154 = vmatprep.subr.mxu0 0.0
    %1155 = vmatpush1.msra.mxu0 0.0
    %1156 = vmatprep.subr.mxu0 0.0
    %1157 = vmatpush1.msra.mxu0 %v1122
    %1158 = vmatprep.subr.mxu0 0.0
    %1159 = vmatpush1.msra.mxu0 %v1120
    %1160 = vmatprep.subr.mxu0 0.0
    %1161 = vmatpush2.msra.mxu0 0.0
    %1162 = vmatprep.subr.mxu0 0.0
    %1163 = vmatpush2.msra.mxu0 0.0
    %1164 = vmatprep.subr.mxu0 0.0
    %1165 = vmatpush2.msra.mxu0 0.0
    %1166 = vmatprep.subr.mxu0 0.0
    %1167 = vmatpush2.msra.mxu0 0.0
    %1168 = vmatprep.subr.mxu0 0.0
    %1169 = vmatpush2.msra.mxu0 0.0
    %1170 = vmatprep.subr.mxu0 0.0
    %1171 = vmatpush2.msra.mxu0 0.0
    %1172 = vmatprep.subr.mxu0 0.0
    %1173 = vmatpush2.msra.mxu0 0.0
    %1174 = vmatprep.subr.mxu0 0.0
    %1175 = vmatpush2.msra.mxu0 0.0
    %1176 = vmatprep.subr.mxu0 0.0
    %1177 = vmatpush2.msra.mxu0 0.0
    %1178 = vmatprep.subr.mxu0 0.0
    %1179 = vmatpush2.msra.mxu0 0.0
    %1180 = vmatprep.subr.mxu0 0.0
    %1181 = vmatpush2.msra.mxu0 0.0
    %1182 = vmatprep.subr.mxu0 0.0
    %1183 = vmatpush2.msra.mxu0 0.0
    %1184 = vmatprep.subr.mxu0 0.0
    %1185 = vmatpush2.msra.mxu0 0.0
    %1186 = vmatprep.subr.mxu0 0.0
    %1187 = vmatpush2.msra.mxu0 0.0
    %1188 = vmatprep.subr.mxu0 0.0
    %1189 = vmatpush2.msra.mxu0 0.0
    %1190 = vmatprep.subr.mxu0 0.0
    %1191 = vmatpush2.msra.mxu0 0.0
    %1192 = vmatprep.mubr.f32.mxu0 0.0
    %1193 = vmatmul.mubr.f32.gmra.mxu0 %v1126
    %v1194 = vpop.f32.mrf.mxu0
    %v1195 = vadd.f32 0.0, %v1194
    %v1196 = vpop.f32.mrf.mxu0
    %1197 = vdwg.mxu0
    %1198 = vrot.lane.b32.xlu0 %v205, 120
    %v1199 = vpop.permute.xlu0 %1198
    %1200 = vrot.lane.b32.xlu0 %v313, 120
    %v1201 = vpop.permute.xlu0 %1200
    %1202 = vrot.lane.b32.xlu0 %v318, 120
    %v1203 = vpop.permute.xlu0 %1202
    %v1204 = vsel %vm321, %v1199, 0
    %v1206 = vsel %vm321, %v1201, 0
    %v1208 = vsel %vm321, %v1203, 0
    %1210 = vmatprep.subr.mxu0 0.0
    %1211 = vmatpush1.xpose.msra.mxu0 0.0
    %1212 = vmatprep.subr.mxu0 0.0
    %1213 = vmatpush1.xpose.msra.mxu0 0.0
    %1214 = vmatprep.subr.mxu0 0.0
    %1215 = vmatpush1.xpose.msra.mxu0 0.0
    %1216 = vmatprep.subr.mxu0 0.0
    %1217 = vmatpush1.xpose.msra.mxu0 0.0
    %1218 = vmatprep.subr.mxu0 0.0
    %1219 = vmatpush1.xpose.msra.mxu0 0.0
    %1220 = vmatprep.subr.mxu0 0.0
    %1221 = vmatpush1.xpose.msra.mxu0 0.0
    %1222 = vmatprep.subr.mxu0 0.0
    %1223 = vmatpush1.xpose.msra.mxu0 0.0
    %1224 = vmatprep.subr.mxu0 0.0
    %1225 = vmatpush1.xpose.msra.mxu0 0.0
    %1226 = vmatprep.subr.mxu0 0.0
    %1227 = vmatpush1.xpose.msra.mxu0 0.0
    %1228 = vmatprep.subr.mxu0 0.0
    %1229 = vmatpush1.xpose.msra.mxu0 0.0
    %1230 = vmatprep.subr.mxu0 0.0
    %1231 = vmatpush1.xpose.msra.mxu0 0.0
    %1232 = vmatprep.subr.mxu0 0.0
    %1233 = vmatpush1.xpose.msra.mxu0 0.0
    %1234 = vmatprep.subr.mxu0 0.0
    %1235 = vmatpush1.xpose.msra.mxu0 0.0
    %1236 = vmatprep.subr.mxu0 0.0
    %1237 = vmatpush1.xpose.msra.mxu0 0.0
    %1238 = vmatprep.subr.mxu0 0.0
    %1239 = vmatpush1.xpose.msra.mxu0 %v1208
    %1240 = vmatprep.subr.mxu0 0.0
    %1241 = vmatpush1.xpose.msra.mxu0 %v1206
    %1242 = vmatprep.subr.mxu0 0.0
    %1243 = vmatpush2.xpose.msra.mxu0 0.0
    %1244 = vmatprep.subr.mxu0 0.0
    %1245 = vmatpush2.xpose.msra.mxu0 0.0
    %1246 = vmatprep.subr.mxu0 0.0
    %1247 = vmatpush2.xpose.msra.mxu0 0.0
    %1248 = vmatprep.subr.mxu0 0.0
    %1249 = vmatpush2.xpose.msra.mxu0 0.0
    %1250 = vmatprep.subr.mxu0 0.0
    %1251 = vmatpush2.xpose.msra.mxu0 0.0
    %1252 = vmatprep.subr.mxu0 0.0
    %1253 = vmatpush2.xpose.msra.mxu0 0.0
    %1254 = vmatprep.subr.mxu0 0.0
    %1255 = vmatpush2.xpose.msra.mxu0 0.0
    %1256 = vmatprep.subr.mxu0 0.0
    %1257 = vmatpush2.xpose.msra.mxu0 0.0
    %1258 = vmatprep.subr.mxu0 0.0
    %1259 = vmatpush2.xpose.msra.mxu0 0.0
    %1260 = vmatprep.subr.mxu0 0.0
    %1261 = vmatpush2.xpose.msra.mxu0 0.0
    %1262 = vmatprep.subr.mxu0 0.0
    %1263 = vmatpush2.xpose.msra.mxu0 0.0
    %1264 = vmatprep.subr.mxu0 0.0
    %1265 = vmatpush2.xpose.msra.mxu0 0.0
    %1266 = vmatprep.subr.mxu0 0.0
    %1267 = vmatpush2.xpose.msra.mxu0 0.0
    %1268 = vmatprep.subr.mxu0 0.0
    %1269 = vmatpush2.xpose.msra.mxu0 0.0
    %1270 = vmatprep.subr.mxu0 0.0
    %1271 = vmatpush2.xpose.msra.mxu0 0.0
    %1272 = vmatprep.subr.mxu0 0.0
    %1273 = vmatpush2.xpose.msra.mxu0 0.0
    %1274 = vmatprep.mubr.f32.mxu0 0.0
    %1275 = vmatmul.mubr.f32.gmra.mxu0 %v1204
    %v1276 = vpop.f32.mrf.mxu0
    %v1277 = vadd.f32 0.0, %v1276
    %v1278 = vpop.f32.mrf.mxu0
    %1279 = vdwg.mxu0
    %v1280 = vmul.f32 %v1277, 0.35355338
    %v1281 = vsel %vm402, %v1280, -inf
    %1282 = vmax.xlane.f32.xlu0 %v1281
    %v1283 = vpop.xlane.xlu0 %1282
    %v1284 = vsub.f32 %v1280, %v1283
    %v1285 = vmul.f32 %v1284, 1.442695
    %v1286 = vpow.pop %v1285
    %v1287 = vsel %vm402, %v1286, 0.0
    %1288 = vadd.xlane.f32.xlu0 %v1287
    %v1289 = vpop.xlane.xlu0 %1288
    %v1290 = vrcp.pop %v1289
    %v1291 = vmul.f32 %v1286, %v1290
    %1292 = vrot.lane.b32.xlu0 %v313, 88
    %v1293 = vpop.permute.xlu0 %1292
    %1294 = vrot.lane.b32.xlu0 %v318, 88
    %v1295 = vpop.permute.xlu0 %1294
    %v1299 = vsel %vm402, %v1291, 0
    %1301 = vmatprep.subr.mxu0 0.0
    %1302 = vmatpush1.msra.mxu0 0.0
    %1303 = vmatprep.subr.mxu0 0.0
    %1304 = vmatpush1.msra.mxu0 0.0
    %1305 = vmatprep.subr.mxu0 0.0
    %1306 = vmatpush1.msra.mxu0 0.0
    %1307 = vmatprep.subr.mxu0 0.0
    %1308 = vmatpush1.msra.mxu0 0.0
    %1309 = vmatprep.subr.mxu0 0.0
    %1310 = vmatpush1.msra.mxu0 0.0
    %1311 = vmatprep.subr.mxu0 0.0
    %1312 = vmatpush1.msra.mxu0 0.0
    %1313 = vmatprep.subr.mxu0 0.0
    %1314 = vmatpush1.msra.mxu0 0.0
    %1315 = vmatprep.subr.mxu0 0.0
    %1316 = vmatpush1.msra.mxu0 0.0
    %1317 = vmatprep.subr.mxu0 0.0
    %1318 = vmatpush1.msra.mxu0 0.0
    %1319 = vmatprep.subr.mxu0 0.0
    %1320 = vmatpush1.msra.mxu0 0.0
    %1321 = vmatprep.subr.mxu0 0.0
    %1322 = vmatpush1.msra.mxu0 0.0
    %1323 = vmatprep.subr.mxu0 0.0
    %1324 = vmatpush1.msra.mxu0 0.0
    %1325 = vmatprep.subr.mxu0 0.0
    %1326 = vmatpush1.msra.mxu0 0.0
    %1327 = vmatprep.subr.mxu0 0.0
    %1328 = vmatpush1.msra.mxu0 0.0
    %1329 = vmatprep.subr.mxu0 0.0
    %1330 = vmatpush1.msra.mxu0 %v1295
    %1331 = vmatprep.subr.mxu0 0.0
    %1332 = vmatpush1.msra.mxu0 %v1293
    %1333 = vmatprep.subr.mxu0 0.0
    %1334 = vmatpush2.msra.mxu0 0.0
    %1335 = vmatprep.subr.mxu0 0.0
    %1336 = vmatpush2.msra.mxu0 0.0
    %1337 = vmatprep.subr.mxu0 0.0
    %1338 = vmatpush2.msra.mxu0 0.0
    %1339 = vmatprep.subr.mxu0 0.0
    %1340 = vmatpush2.msra.mxu0 0.0
    %1341 = vmatprep.subr.mxu0 0.0
    %1342 = vmatpush2.msra.mxu0 0.0
    %1343 = vmatprep.subr.mxu0 0.0
    %1344 = vmatpush2.msra.mxu0 0.0
    %1345 = vmatprep.subr.mxu0 0.0
    %1346 = vmatpush2.msra.mxu0 0.0
    %1347 = vmatprep.subr.mxu0 0.0
    %1348 = vmatpush2.msra.mxu0 0.0
    %1349 = vmatprep.subr.mxu0 0.0
    %1350 = vmatpush2.msra.mxu0 0.0
    %1351 = vmatprep.subr.mxu0 0.0
    %1352 = vmatpush2.msra.mxu0 0.0
    %1353 = vmatprep.subr.mxu0 0.0
    %1354 = vmatpush2.msra.mxu0 0.0
    %1355 = vmatprep.subr.mxu0 0.0
    %1356 = vmatpush2.msra.mxu0 0.0
    %1357 = vmatprep.subr.mxu0 0.0
    %1358 = vmatpush2.msra.mxu0 0.0
    %1359 = vmatprep.subr.mxu0 0.0
    %1360 = vmatpush2.msra.mxu0 0.0
    %1361 = vmatprep.subr.mxu0 0.0
    %1362 = vmatpush2.msra.mxu0 0.0
    %1363 = vmatprep.subr.mxu0 0.0
    %1364 = vmatpush2.msra.mxu0 0.0
    %1365 = vmatprep.mubr.f32.mxu0 0.0
    %1366 = vmatmul.mubr.f32.gmra.mxu0 %v1299
    %v1367 = vpop.f32.mrf.mxu0
    %v1368 = vadd.f32 0.0, %v1367
    %v1369 = vpop.f32.mrf.mxu0
    %1370 = vdwg.mxu0
    %1371 = vrot.lane.b32.xlu0 %v205, 112
    %v1372 = vpop.permute.xlu0 %1371
    %1373 = vrot.lane.b32.xlu0 %v313, 112
    %v1374 = vpop.permute.xlu0 %1373
    %1375 = vrot.lane.b32.xlu0 %v318, 112
    %v1376 = vpop.permute.xlu0 %1375
    %v1377 = vsel %vm321, %v1372, 0
    %v1379 = vsel %vm321, %v1374, 0
    %v1381 = vsel %vm321, %v1376, 0
    %1383 = vmatprep.subr.mxu0 0.0
    %1384 = vmatpush1.xpose.msra.mxu0 0.0
    %1385 = vmatprep.subr.mxu0 0.0
    %1386 = vmatpush1.xpose.msra.mxu0 0.0
    %1387 = vmatprep.subr.mxu0 0.0
    %1388 = vmatpush1.xpose.msra.mxu0 0.0
    %1389 = vmatprep.subr.mxu0 0.0
    %1390 = vmatpush1.xpose.msra.mxu0 0.0
    %1391 = vmatprep.subr.mxu0 0.0
    %1392 = vmatpush1.xpose.msra.mxu0 0.0
    %1393 = vmatprep.subr.mxu0 0.0
    %1394 = vmatpush1.xpose.msra.mxu0 0.0
    %1395 = vmatprep.subr.mxu0 0.0
    %1396 = vmatpush1.xpose.msra.mxu0 0.0
    %1397 = vmatprep.subr.mxu0 0.0
    %1398 = vmatpush1.xpose.msra.mxu0 0.0
    %1399 = vmatprep.subr.mxu0 0.0
    %1400 = vmatpush1.xpose.msra.mxu0 0.0
    %1401 = vmatprep.subr.mxu0 0.0
    %1402 = vmatpush1.xpose.msra.mxu0 0.0
    %1403 = vmatprep.subr.mxu0 0.0
    %1404 = vmatpush1.xpose.msra.mxu0 0.0
    %1405 = vmatprep.subr.mxu0 0.0
    %1406 = vmatpush1.xpose.msra.mxu0 0.0
    %1407 = vmatprep.subr.mxu0 0.0
    %1408 = vmatpush1.xpose.msra.mxu0 0.0
    %1409 = vmatprep.subr.mxu0 0.0
    %1410 = vmatpush1.xpose.msra.mxu0 0.0
    %1411 = vmatprep.subr.mxu0 0.0
    %1412 = vmatpush1.xpose.msra.mxu0 %v1381
    %1413 = vmatprep.subr.mxu0 0.0
    %1414 = vmatpush1.xpose.msra.mxu0 %v1379
    %1415 = vmatprep.subr.mxu0 0.0
    %1416 = vmatpush2.xpose.msra.mxu0 0.0
    %1417 = vmatprep.subr.mxu0 0.0
    %1418 = vmatpush2.xpose.msra.mxu0 0.0
    %1419 = vmatprep.subr.mxu0 0.0
    %1420 = vmatpush2.xpose.msra.mxu0 0.0
    %1421 = vmatprep.subr.mxu0 0.0
    %1422 = vmatpush2.xpose.msra.mxu0 0.0
    %1423 = vmatprep.subr.mxu0 0.0
    %1424 = vmatpush2.xpose.msra.mxu0 0.0
    %1425 = vmatprep.subr.mxu0 0.0
    %1426 = vmatpush2.xpose.msra.mxu0 0.0
    %1427 = vmatprep.subr.mxu0 0.0
    %1428 = vmatpush2.xpose.msra.mxu0 0.0
    %1429 = vmatprep.subr.mxu0 0.0
    %1430 = vmatpush2.xpose.msra.mxu0 0.0
    %1431 = vmatprep.subr.mxu0 0.0
    %1432 = vmatpush2.xpose.msra.mxu0 0.0
    %1433 = vmatprep.subr.mxu0 0.0
    %1434 = vmatpush2.xpose.msra.mxu0 0.0
    %1435 = vmatprep.subr.mxu0 0.0
    %1436 = vmatpush2.xpose.msra.mxu0 0.0
    %1437 = vmatprep.subr.mxu0 0.0
    %1438 = vmatpush2.xpose.msra.mxu0 0.0
    %1439 = vmatprep.subr.mxu0 0.0
    %1440 = vmatpush2.xpose.msra.mxu0 0.0
    %1441 = vmatprep.subr.mxu0 0.0
    %1442 = vmatpush2.xpose.msra.mxu0 0.0
    %1443 = vmatprep.subr.mxu0 0.0
    %1444 = vmatpush2.xpose.msra.mxu0 0.0
    %1445 = vmatprep.subr.mxu0 0.0
    %1446 = vmatpush2.xpose.msra.mxu0 0.0
    %1447 = vmatprep.mubr.f32.mxu0 0.0
    %1448 = vmatmul.mubr.f32.gmra.mxu0 %v1377
    %v1449 = vpop.f32.mrf.mxu0
    %v1450 = vadd.f32 0.0, %v1449
    %v1451 = vpop.f32.mrf.mxu0
    %1452 = vdwg.mxu0
    %v1453 = vmul.f32 %v1450, 0.35355338
    %v1454 = vsel %vm402, %v1453, -inf
    %1455 = vmax.xlane.f32.xlu0 %v1454
    %v1456 = vpop.xlane.xlu0 %1455
    %v1457 = vsub.f32 %v1453, %v1456
    %v1458 = vmul.f32 %v1457, 1.442695
    %v1459 = vpow.pop %v1458
    %v1460 = vsel %vm402, %v1459, 0.0
    %1461 = vadd.xlane.f32.xlu0 %v1460
    %v1462 = vpop.xlane.xlu0 %1461
    %v1463 = vrcp.pop %v1462
    %v1464 = vmul.f32 %v1459, %v1463
    %1465 = vrot.lane.b32.xlu0 %v313, 80
    %v1466 = vpop.permute.xlu0 %1465
    %1467 = vrot.lane.b32.xlu0 %v318, 80
    %v1468 = vpop.permute.xlu0 %1467
    %v1472 = vsel %vm402, %v1464, 0
    %1474 = vmatprep.subr.mxu0 0.0
    %1475 = vmatpush1.msra.mxu0 0.0
    %1476 = vmatprep.subr.mxu0 0.0
    %1477 = vmatpush1.msra.mxu0 0.0
    %1478 = vmatprep.subr.mxu0 0.0
    %1479 = vmatpush1.msra.mxu0 0.0
    %1480 = vmatprep.subr.mxu0 0.0
    %1481 = vmatpush1.msra.mxu0 0.0
    %1482 = vmatprep.subr.mxu0 0.0
    %1483 = vmatpush1.msra.mxu0 0.0
    %1484 = vmatprep.subr.mxu0 0.0
    %1485 = vmatpush1.msra.mxu0 0.0
    %1486 = vmatprep.subr.mxu0 0.0
    %1487 = vmatpush1.msra.mxu0 0.0
    %1488 = vmatprep.subr.mxu0 0.0
    %1489 = vmatpush1.msra.mxu0 0.0
    %1490 = vmatprep.subr.mxu0 0.0
    %1491 = vmatpush1.msra.mxu0 0.0
    %1492 = vmatprep.subr.mxu0 0.0
    %1493 = vmatpush1.msra.mxu0 0.0
    %1494 = vmatprep.subr.mxu0 0.0
    %1495 = vmatpush1.msra.mxu0 0.0
    %1496 = vmatprep.subr.mxu0 0.0
    %1497 = vmatpush1.msra.mxu0 0.0
    %1498 = vmatprep.subr.mxu0 0.0
    %1499 = vmatpush1.msra.mxu0 0.0
    %1500 = vmatprep.subr.mxu0 0.0
    %1501 = vmatpush1.msra.mxu0 0.0
    %1502 = vmatprep.subr.mxu0 0.0
    %1503 = vmatpush1.msra.mxu0 %v1468
    %1504 = vmatprep.subr.mxu0 0.0
    %1505 = vmatpush1.msra.mxu0 %v1466
    %1506 = vmatprep.subr.mxu0 0.0
    %1507 = vmatpush2.msra.mxu0 0.0
    %1508 = vmatprep.subr.mxu0 0.0
    %1509 = vmatpush2.msra.mxu0 0.0
    %1510 = vmatprep.subr.mxu0 0.0
    %1511 = vmatpush2.msra.mxu0 0.0
    %1512 = vmatprep.subr.mxu0 0.0
    %1513 = vmatpush2.msra.mxu0 0.0
    %1514 = vmatprep.subr.mxu0 0.0
    %1515 = vmatpush2.msra.mxu0 0.0
    %1516 = vmatprep.subr.mxu0 0.0
    %1517 = vmatpush2.msra.mxu0 0.0
    %1518 = vmatprep.subr.mxu0 0.0
    %1519 = vmatpush2.msra.mxu0 0.0
    %1520 = vmatprep.subr.mxu0 0.0
    %1521 = vmatpush2.msra.mxu0 0.0
    %1522 = vmatprep.subr.mxu0 0.0
    %1523 = vmatpush2.msra.mxu0 0.0
    %1524 = vmatprep.subr.mxu0 0.0
    %1525 = vmatpush2.msra.mxu0 0.0
    %1526 = vmatprep.subr.mxu0 0.0
    %1527 = vmatpush2.msra.mxu0 0.0
    %1528 = vmatprep.subr.mxu0 0.0
    %1529 = vmatpush2.msra.mxu0 0.0
    %1530 = vmatprep.subr.mxu0 0.0
    %1531 = vmatpush2.msra.mxu0 0.0
    %1532 = vmatprep.subr.mxu0 0.0
    %1533 = vmatpush2.msra.mxu0 0.0
    %1534 = vmatprep.subr.mxu0 0.0
    %1535 = vmatpush2.msra.mxu0 0.0
    %1536 = vmatprep.subr.mxu0 0.0
    %1537 = vmatpush2.msra.mxu0 0.0
    %1538 = vmatprep.mubr.f32.mxu0 0.0
    %1539 = vmatmul.mubr.f32.gmra.mxu0 %v1472
    %v1540 = vpop.f32.mrf.mxu0
    %v1541 = vadd.f32 0.0, %v1540
    %v1542 = vpop.f32.mrf.mxu0
    %1543 = vdwg.mxu0
    %1544 = vrot.lane.b32.xlu0 %v205, 104
    %v1545 = vpop.permute.xlu0 %1544
    %1546 = vrot.lane.b32.xlu0 %v313, 104
    %v1547 = vpop.permute.xlu0 %1546
    %1548 = vrot.lane.b32.xlu0 %v318, 104
    %v1549 = vpop.permute.xlu0 %1548
    %v1550 = vsel %vm321, %v1545, 0
    %v1552 = vsel %vm321, %v1547, 0
    %v1554 = vsel %vm321, %v1549, 0
    %1556 = vmatprep.subr.mxu0 0.0
    %1557 = vmatpush1.xpose.msra.mxu0 0.0
    %1558 = vmatprep.subr.mxu0 0.0
    %1559 = vmatpush1.xpose.msra.mxu0 0.0
    %1560 = vmatprep.subr.mxu0 0.0
    %1561 = vmatpush1.xpose.msra.mxu0 0.0
    %1562 = vmatprep.subr.mxu0 0.0
    %1563 = vmatpush1.xpose.msra.mxu0 0.0
    %1564 = vmatprep.subr.mxu0 0.0
    %1565 = vmatpush1.xpose.msra.mxu0 0.0
    %1566 = vmatprep.subr.mxu0 0.0
    %1567 = vmatpush1.xpose.msra.mxu0 0.0
    %1568 = vmatprep.subr.mxu0 0.0
    %1569 = vmatpush1.xpose.msra.mxu0 0.0
    %1570 = vmatprep.subr.mxu0 0.0
    %1571 = vmatpush1.xpose.msra.mxu0 0.0
    %1572 = vmatprep.subr.mxu0 0.0
    %1573 = vmatpush1.xpose.msra.mxu0 0.0
    %1574 = vmatprep.subr.mxu0 0.0
    %1575 = vmatpush1.xpose.msra.mxu0 0.0
    %1576 = vmatprep.subr.mxu0 0.0
    %1577 = vmatpush1.xpose.msra.mxu0 0.0
    %1578 = vmatprep.subr.mxu0 0.0
    %1579 = vmatpush1.xpose.msra.mxu0 0.0
    %1580 = vmatprep.subr.mxu0 0.0
    %1581 = vmatpush1.xpose.msra.mxu0 0.0
    %1582 = vmatprep.subr.mxu0 0.0
    %1583 = vmatpush1.xpose.msra.mxu0 0.0
    %1584 = vmatprep.subr.mxu0 0.0
    %1585 = vmatpush1.xpose.msra.mxu0 %v1554
    %1586 = vmatprep.subr.mxu0 0.0
    %1587 = vmatpush1.xpose.msra.mxu0 %v1552
    %1588 = vmatprep.subr.mxu0 0.0
    %1589 = vmatpush2.xpose.msra.mxu0 0.0
    %1590 = vmatprep.subr.mxu0 0.0
    %1591 = vmatpush2.xpose.msra.mxu0 0.0
    %1592 = vmatprep.subr.mxu0 0.0
    %1593 = vmatpush2.xpose.msra.mxu0 0.0
    %1594 = vmatprep.subr.mxu0 0.0
    %1595 = vmatpush2.xpose.msra.mxu0 0.0
    %1596 = vmatprep.subr.mxu0 0.0
    %1597 = vmatpush2.xpose.msra.mxu0 0.0
    %1598 = vmatprep.subr.mxu0 0.0
    %1599 = vmatpush2.xpose.msra.mxu0 0.0
    %1600 = vmatprep.subr.mxu0 0.0
    %1601 = vmatpush2.xpose.msra.mxu0 0.0
    %1602 = vmatprep.subr.mxu0 0.0
    %1603 = vmatpush2.xpose.msra.mxu0 0.0
    %1604 = vmatprep.subr.mxu0 0.0
    %1605 = vmatpush2.xpose.msra.mxu0 0.0
    %1606 = vmatprep.subr.mxu0 0.0
    %1607 = vmatpush2.xpose.msra.mxu0 0.0
    %1608 = vmatprep.subr.mxu0 0.0
    %1609 = vmatpush2.xpose.msra.mxu0 0.0
    %1610 = vmatprep.subr.mxu0 0.0
    %1611 = vmatpush2.xpose.msra.mxu0 0.0
    %1612 = vmatprep.subr.mxu0 0.0
    %1613 = vmatpush2.xpose.msra.mxu0 0.0
    %1614 = vmatprep.subr.mxu0 0.0
    %1615 = vmatpush2.xpose.msra.mxu0 0.0
    %1616 = vmatprep.subr.mxu0 0.0
    %1617 = vmatpush2.xpose.msra.mxu0 0.0
    %1618 = vmatprep.subr.mxu0 0.0
    %1619 = vmatpush2.xpose.msra.mxu0 0.0
    %1620 = vmatprep.mubr.f32.mxu0 0.0
    %1621 = vmatmul.mubr.f32.gmra.mxu0 %v1550
    %v1622 = vpop.f32.mrf.mxu0
    %v1623 = vadd.f32 0.0, %v1622
    %v1624 = vpop.f32.mrf.mxu0
    %1625 = vdwg.mxu0
    %v1626 = vmul.f32 %v1623, 0.35355338
    %v1627 = vsel %vm402, %v1626, -inf
    %1628 = vmax.xlane.f32.xlu0 %v1627
    %v1629 = vpop.xlane.xlu0 %1628
    %v1630 = vsub.f32 %v1626, %v1629
    %v1631 = vmul.f32 %v1630, 1.442695
    %v1632 = vpow.pop %v1631
    %v1633 = vsel %vm402, %v1632, 0.0
    %1634 = vadd.xlane.f32.xlu0 %v1633
    %v1635 = vpop.xlane.xlu0 %1634
    %v1636 = vrcp.pop %v1635
    %v1637 = vmul.f32 %v1632, %v1636
    %1638 = vrot.lane.b32.xlu0 %v313, 72
    %v1639 = vpop.permute.xlu0 %1638
    %1640 = vrot.lane.b32.xlu0 %v318, 72
    %v1641 = vpop.permute.xlu0 %1640
    %v1645 = vsel %vm402, %v1637, 0
    %1647 = vmatprep.subr.mxu0 0.0
    %1648 = vmatpush1.msra.mxu0 0.0
    %1649 = vmatprep.subr.mxu0 0.0
    %1650 = vmatpush1.msra.mxu0 0.0
    %1651 = vmatprep.subr.mxu0 0.0
    %1652 = vmatpush1.msra.mxu0 0.0
    %1653 = vmatprep.subr.mxu0 0.0
    %1654 = vmatpush1.msra.mxu0 0.0
    %1655 = vmatprep.subr.mxu0 0.0
    %1656 = vmatpush1.msra.mxu0 0.0
    %1657 = vmatprep.subr.mxu0 0.0
    %1658 = vmatpush1.msra.mxu0 0.0
    %1659 = vmatprep.subr.mxu0 0.0
    %1660 = vmatpush1.msra.mxu0 0.0
    %1661 = vmatprep.subr.mxu0 0.0
    %1662 = vmatpush1.msra.mxu0 0.0
    %1663 = vmatprep.subr.mxu0 0.0
    %1664 = vmatpush1.msra.mxu0 0.0
    %1665 = vmatprep.subr.mxu0 0.0
    %1666 = vmatpush1.msra.mxu0 0.0
    %1667 = vmatprep.subr.mxu0 0.0
    %1668 = vmatpush1.msra.mxu0 0.0
    %1669 = vmatprep.subr.mxu0 0.0
    %1670 = vmatpush1.msra.mxu0 0.0
    %1671 = vmatprep.subr.mxu0 0.0
    %1672 = vmatpush1.msra.mxu0 0.0
    %1673 = vmatprep.subr.mxu0 0.0
    %1674 = vmatpush1.msra.mxu0 0.0
    %1675 = vmatprep.subr.mxu0 0.0
    %1676 = vmatpush1.msra.mxu0 %v1641
    %1677 = vmatprep.subr.mxu0 0.0
    %1678 = vmatpush1.msra.mxu0 %v1639
    %1679 = vmatprep.subr.mxu0 0.0
    %1680 = vmatpush2.msra.mxu0 0.0
    %1681 = vmatprep.subr.mxu0 0.0
    %1682 = vmatpush2.msra.mxu0 0.0
    %1683 = vmatprep.subr.mxu0 0.0
    %1684 = vmatpush2.msra.mxu0 0.0
    %1685 = vmatprep.subr.mxu0 0.0
    %1686 = vmatpush2.msra.mxu0 0.0
    %1687 = vmatprep.subr.mxu0 0.0
    %1688 = vmatpush2.msra.mxu0 0.0
    %1689 = vmatprep.subr.mxu0 0.0
    %1690 = vmatpush2.msra.mxu0 0.0
    %1691 = vmatprep.subr.mxu0 0.0
    %1692 = vmatpush2.msra.mxu0 0.0
    %1693 = vmatprep.subr.mxu0 0.0
    %1694 = vmatpush2.msra.mxu0 0.0
    %1695 = vmatprep.subr.mxu0 0.0
    %1696 = vmatpush2.msra.mxu0 0.0
    %1697 = vmatprep.subr.mxu0 0.0
    %1698 = vmatpush2.msra.mxu0 0.0
    %1699 = vmatprep.subr.mxu0 0.0
    %1700 = vmatpush2.msra.mxu0 0.0
    %1701 = vmatprep.subr.mxu0 0.0
    %1702 = vmatpush2.msra.mxu0 0.0
    %1703 = vmatprep.subr.mxu0 0.0
    %1704 = vmatpush2.msra.mxu0 0.0
    %1705 = vmatprep.subr.mxu0 0.0
    %1706 = vmatpush2.msra.mxu0 0.0
    %1707 = vmatprep.subr.mxu0 0.0
    %1708 = vmatpush2.msra.mxu0 0.0
    %1709 = vmatprep.subr.mxu0 0.0
    %1710 = vmatpush2.msra.mxu0 0.0
    %1711 = vmatprep.mubr.f32.mxu0 0.0
    %1712 = vmatmul.mubr.f32.gmra.mxu0 %v1645
    %v1713 = vpop.f32.mrf.mxu0
    %v1714 = vadd.f32 0.0, %v1713
    %v1715 = vpop.f32.mrf.mxu0
    %1716 = vdwg.mxu0
    %1718 = vrot.lane.b32.xlu0 %v1368, 8
    %v1719 = vpop.permute.xlu0 %1718
    %1722 = vrot.lane.b32.xlu0 %v1541, 16
    %v1723 = vpop.permute.xlu0 %1722
    %1726 = vrot.lane.b32.xlu0 %v1714, 24
    %v1727 = vpop.permute.xlu0 %1726
    %v1729 = vsel %vm321, %v1195, %v1719
    %v1730 = vsel %vm402, %v1729, %v1723
    %v1731 = vsel %vm1026, %v1730, %v1727
    %v1732 = vld [vmem:[#allocation7] sm:$0xff]
    %v1733 = vld [vmem:[#allocation7 + $0x8] sm:$0xff]
    %v1734 = vld [vmem:[#allocation7 + $0x10] sm:$0xff]
    %v1735 = vld [vmem:[#allocation7 + $0x18] sm:$0xff]
    %v1736 = vld [vmem:[%s7] sm:$0x1]
    %v1738 = vlaneseq
    %v1739 = vshrl.u32 %v1738, 7
    %v1740 = vsub.s32 0, %v1739
    %v1741 = vrot.slane %v1736, %v1740
    %v1744 = vsel %vm126, %v1027, 0
    %v1747 = vsel %vm126, %v1731, 0
    %1749 = vmatprep.subr.mxu0 0.0
    %1750 = vmatpush1.msra.mxu0 0.0
    %1751 = vmatprep.subr.mxu0 0.0
    %1752 = vmatpush1.msra.mxu0 0.0
    %1753 = vmatprep.subr.mxu0 0.0
    %1754 = vmatpush1.msra.mxu0 0.0
    %1755 = vmatprep.subr.mxu0 0.0
    %1756 = vmatpush1.msra.mxu0 0.0
    %1757 = vmatprep.subr.mxu0 0.0
    %1758 = vmatpush1.msra.mxu0 0.0
    %1759 = vmatprep.subr.mxu0 0.0
    %1760 = vmatpush1.msra.mxu0 0.0
    %1761 = vmatprep.subr.mxu0 0.0
    %1762 = vmatpush1.msra.mxu0 0.0
    %1763 = vmatprep.subr.mxu0 0.0
    %1764 = vmatpush1.msra.mxu0 0.0
    %1765 = vmatprep.subr.mxu0 0.0
    %1766 = vmatpush1.msra.mxu0 0.0
    %1767 = vmatprep.subr.mxu0 0.0
    %1768 = vmatpush1.msra.mxu0 0.0
    %1769 = vmatprep.subr.mxu0 0.0
    %1770 = vmatpush1.msra.mxu0 0.0
    %1771 = vmatprep.subr.mxu0 0.0
    %1772 = vmatpush1.msra.mxu0 0.0
    %1773 = vmatprep.subr.mxu0 0.0
    %1774 = vmatpush1.msra.mxu0 %v1735
    %1775 = vmatprep.subr.mxu0 0.0
    %1776 = vmatpush1.msra.mxu0 %v1734
    %1777 = vmatprep.subr.mxu0 0.0
    %1778 = vmatpush1.msra.mxu0 %v1733
    %1779 = vmatprep.subr.mxu0 0.0
    %1780 = vmatpush1.msra.mxu0 %v1732
    %1781 = vmatprep.subr.mxu0 0.0
    %1782 = vmatpush2.msra.mxu0 0.0
    %1783 = vmatprep.subr.mxu0 0.0
    %1784 = vmatpush2.msra.mxu0 0.0
    %1785 = vmatprep.subr.mxu0 0.0
    %1786 = vmatpush2.msra.mxu0 0.0
    %1787 = vmatprep.subr.mxu0 0.0
    %1788 = vmatpush2.msra.mxu0 0.0
    %1789 = vmatprep.subr.mxu0 0.0
    %1790 = vmatpush2.msra.mxu0 0.0
    %1791 = vmatprep.subr.mxu0 0.0
    %1792 = vmatpush2.msra.mxu0 0.0
    %1793 = vmatprep.subr.mxu0 0.0
    %1794 = vmatpush2.msra.mxu0 0.0
    %1795 = vmatprep.subr.mxu0 0.0
    %1796 = vmatpush2.msra.mxu0 0.0
    %1797 = vmatprep.subr.mxu0 0.0
    %1798 = vmatpush2.msra.mxu0 0.0
    %1799 = vmatprep.subr.mxu0 0.0
    %1800 = vmatpush2.msra.mxu0 0.0
    %1801 = vmatprep.subr.mxu0 0.0
    %1802 = vmatpush2.msra.mxu0 0.0
    %1803 = vmatprep.subr.mxu0 0.0
    %1804 = vmatpush2.msra.mxu0 0.0
    %1805 = vmatprep.subr.mxu0 0.0
    %1806 = vmatpush2.msra.mxu0 0.0
    %1807 = vmatprep.subr.mxu0 0.0
    %1808 = vmatpush2.msra.mxu0 0.0
    %1809 = vmatprep.subr.mxu0 0.0
    %1810 = vmatpush2.msra.mxu0 0.0
    %1811 = vmatprep.subr.mxu0 0.0
    %1812 = vmatpush2.msra.mxu0 0.0
    %1813 = vmatprep.mubr.f32.mxu0 0.0
    %1814 = vmatmul.mubr.f32.gmra.mxu0 %v1744
    %v1815 = vpop.f32.mrf.mxu0
    %v1816 = vadd.f32 %v1741, %v1815
    %v1817 = vpop.f32.mrf.mxu0
    %1818 = vmatprep.mubr.f32.mxu0 0.0
    %1819 = vmatmul.mubr.f32.gmra.mxu0 %v1747
    %v1820 = vpop.f32.mrf.mxu0
    %v1821 = vadd.f32 %v1741, %v1820
    %v1822 = vpop.f32.mrf.mxu0
    %1823 = vdwg.mxu0
    %v1824 = vadd.f32 %v1816, %v109
    %v1825 = vadd.f32 %v1821, %v110
    %v1826 = vld [vmem:[%s8] sm:$0x1]
    %v1827 = vld [vmem:[%s9] sm:$0x1]
    %v1828 = vsel %vm126, %v1824, 0.0
    %1829 = vadd.xlane.f32.xlu0 %v1828
    %v1830 = vpop.xlane.xlu0 %1829
    %v1831 = vsel %vm126, %v1825, 0.0
    %1832 = vadd.xlane.f32.xlu0 %v1831
    %v1833 = vpop.xlane.xlu0 %1832
    %v1834 = vrcp.pop 32.0
    %v1835 = vmul.f32 %v1830, %v1834
    %v1836 = vmul.f32 %v1833, %v1834
    %v1837 = vsub.f32 %v1824, %v1835
    %v1838 = vsub.f32 %v1825, %v1836
    %v1839 = vmul.f32 %v1837, %v1837
    %v1840 = vmul.f32 %v1838, %v1838
    %v1841 = vsel %vm126, %v1839, 0.0
    %1842 = vadd.xlane.f32.xlu0 %v1841
    %v1843 = vpop.xlane.xlu0 %1842
    %v1844 = vsel %vm126, %v1840, 0.0
    %1845 = vadd.xlane.f32.xlu0 %v1844
    %v1846 = vpop.xlane.xlu0 %1845
    %v1847 = vmul.f32 %v1843, %v1834
    %v1848 = vmul.f32 %v1846, %v1834
    %v1849 = vadd.f32 %v1847, 1e-12
    %v1850 = vadd.f32 %v1848, 1e-12
    %v1851 = vrsqrt.pop %v1849
    %v1852 = vrsqrt.pop %v1850
    %v1853 = vmul.f32 %v1837, %v1851
    %v1854 = vmul.f32 %v1838, %v1852
    %v1856 = vlaneseq
    %v1857 = vshrl.u32 %v1856, 7
    %v1858 = vsub.s32 0, %v1857
    %v1859 = vrot.slane %v1826, %v1858
    %v1861 = vmul.f32 %v1853, %v1859
    %v1862 = vmul.f32 %v1854, %v1859
    %v1864 = vlaneseq
    %v1865 = vshrl.u32 %v1864, 7
    %v1866 = vsub.s32 0, %v1865
    %v1867 = vrot.slane %v1827, %v1866
    %v1869 = vadd.f32 %v1861, %v1867
    %v1870 = vadd.f32 %v1862, %v1867
    %v1871 = vld [vmem:[#allocation8] sm:$0xff]
    %v1872 = vld [vmem:[#allocation8 + $0x8] sm:$0xff]
    %v1873 = vld [vmem:[#allocation8 + $0x10] sm:$0xff]
    %v1874 = vld [vmem:[#allocation8 + $0x18] sm:$0xff]
    %v1875 = vld [vmem:[%s11] sm:$0x1]
    %v1877 = vlaneseq
    %v1878 = vshrl.u32 %v1877, 7
    %v1879 = vsub.s32 0, %v1878
    %v1880 = vrot.slane %v1875, %v1879
    %v1883 = vsel %vm126, %v1869, 0
    %v1886 = vsel %vm126, %v1870, 0
    %1888 = vmatprep.subr.mxu0 0.0
    %1889 = vmatpush1.msra.mxu0 0.0
    %1890 = vmatprep.subr.mxu0 0.0
    %1891 = vmatpush1.msra.mxu0 0.0
    %1892 = vmatprep.subr.mxu0 0.0
    %1893 = vmatpush1.msra.mxu0 0.0
    %1894 = vmatprep.subr.mxu0 0.0
    %1895 = vmatpush1.msra.mxu0 0.0
    %1896 = vmatprep.subr.mxu0 0.0
    %1897 = vmatpush1.msra.mxu0 0.0
    %1898 = vmatprep.subr.mxu0 0.0
    %1899 = vmatpush1.msra.mxu0 0.0
    %1900 = vmatprep.subr.mxu0 0.0
    %1901 = vmatpush1.msra.mxu0 0.0
    %1902 = vmatprep.subr.mxu0 0.0
    %1903 = vmatpush1.msra.mxu0 0.0
    %1904 = vmatprep.subr.mxu0 0.0
    %1905 = vmatpush1.msra.mxu0 0.0
    %1906 = vmatprep.subr.mxu0 0.0
    %1907 = vmatpush1.msra.mxu0 0.0
    %1908 = vmatprep.subr.mxu0 0.0
    %1909 = vmatpush1.msra.mxu0 0.0
    %1910 = vmatprep.subr.mxu0 0.0
    %1911 = vmatpush1.msra.mxu0 0.0
    %1912 = vmatprep.subr.mxu0 0.0
    %1913 = vmatpush1.msra.mxu0 %v1874
    %1914 = vmatprep.subr.mxu0 0.0
    %1915 = vmatpush1.msra.mxu0 %v1873
    %1916 = vmatprep.subr.mxu0 0.0
    %1917 = vmatpush1.msra.mxu0 %v1872
    %1918 = vmatprep.subr.mxu0 0.0
    %1919 = vmatpush1.msra.mxu0 %v1871
    %1920 = vmatprep.subr.mxu0 0.0
    %1921 = vmatpush2.msra.mxu0 0.0
    %1922 = vmatprep.subr.mxu0 0.0
    %1923 = vmatpush2.msra.mxu0 0.0
    %1924 = vmatprep.subr.mxu0 0.0
    %1925 = vmatpush2.msra.mxu0 0.0
    %1926 = vmatprep.subr.mxu0 0.0
    %1927 = vmatpush2.msra.mxu0 0.0
    %1928 = vmatprep.subr.mxu0 0.0
    %1929 = vmatpush2.msra.mxu0 0.0
    %1930 = vmatprep.subr.mxu0 0.0
    %1931 = vmatpush2.msra.mxu0 0.0
    %1932 = vmatprep.subr.mxu0 0.0
    %1933 = vmatpush2.msra.mxu0 0.0
    %1934 = vmatprep.subr.mxu0 0.0
    %1935 = vmatpush2.msra.mxu0 0.0
    %1936 = vmatprep.subr.mxu0 0.0
    %1937 = vmatpush2.msra.mxu0 0.0
    %1938 = vmatprep.subr.mxu0 0.0
    %1939 = vmatpush2.msra.mxu0 0.0
    %1940 = vmatprep.subr.mxu0 0.0
    %1941 = vmatpush2.msra.mxu0 0.0
    %1942 = vmatprep.subr.mxu0 0.0
    %1943 = vmatpush2.msra.mxu0 0.0
    %1944 = vmatprep.subr.mxu0 0.0
    %1945 = vmatpush2.msra.mxu0 0.0
    %1946 = vmatprep.subr.mxu0 0.0
    %1947 = vmatpush2.msra.mxu0 0.0
    %1948 = vmatprep.subr.mxu0 0.0
    %1949 = vmatpush2.msra.mxu0 0.0
    %1950 = vmatprep.subr.mxu0 0.0
    %1951 = vmatpush2.msra.mxu0 0.0
    %1952 = vmatprep.mubr.f32.mxu0 0.0
    %1953 = vmatmul.mubr.f32.gmra.mxu0 %v1883
    %v1954 = vpop.f32.mrf.mxu0
    %v1955 = vadd.f32 %v1880, %v1954
    %v1956 = vpop.f32.mrf.mxu0
    %1957 = vmatprep.mubr.f32.mxu0 0.0
    %1958 = vmatmul.mubr.f32.gmra.mxu0 %v1886
    %v1959 = vpop.f32.mrf.mxu0
    %v1960 = vadd.f32 %v1880, %v1959
    %v1961 = vpop.f32.mrf.mxu0
    %1962 = vdwg.mxu0
    %v1963 = vmul.f32 %v1955, 0.5
    %v1964 = vmul.f32 %v1960, 0.5
    %v1965 = vmul.f32 %v1955, 0.70710677
    %v1966 = vmul.f32 %v1960, 0.70710677
    %v1967 = verf.f32.pop %v1965
    %v1968 = verf.f32.pop %v1966
    %v1969 = vadd.f32 %v1967, 1.0
    %v1970 = vadd.f32 %v1968, 1.0
    %v1971 = vmul.f32 %v1963, %v1969
    %v1972 = vmul.f32 %v1964, %v1970
    %v1973 = vld [vmem:[%s12] sm:$0xff]
    %v1974 = vld [vmem:[%s12 + $0x8] sm:$0xff]
    %v1975 = vld [vmem:[%s12 + $0x10] sm:$0xff]
    %v1976 = vld [vmem:[%s12 + $0x18] sm:$0xff]
    %v1977 = vld [vmem:[%s12 + $0x20] sm:$0xff]
    %v1978 = vld [vmem:[%s12 + $0x28] sm:$0xff]
    %v1979 = vld [vmem:[%s12 + $0x30] sm:$0xff]
    %v1980 = vld [vmem:[%s12 + $0x38] sm:$0xff]
    %v1981 = vld [vmem:[%s13] sm:$0x1]
    %v1983 = vlaneseq
    %v1984 = vshrl.u32 %v1983, 7
    %v1985 = vsub.s32 0, %v1984
    %v1986 = vrot.slane %v1981, %v1985
    %v1989 = vsel %vm223, %v1971, 0
    %v1992 = vsel %vm223, %v1972, 0
    %1994 = vmatprep.subr.mxu0 0.0
    %1995 = vmatpush1.msra.mxu0 0.0
    %1996 = vmatprep.subr.mxu0 0.0
    %1997 = vmatpush1.msra.mxu0 0.0
    %1998 = vmatprep.subr.mxu0 0.0
    %1999 = vmatpush1.msra.mxu0 0.0
    %2000 = vmatprep.subr.mxu0 0.0
    %2001 = vmatpush1.msra.mxu0 0.0
    %2002 = vmatprep.subr.mxu0 0.0
    %2003 = vmatpush1.msra.mxu0 0.0
    %2004 = vmatprep.subr.mxu0 0.0
    %2005 = vmatpush1.msra.mxu0 0.0
    %2006 = vmatprep.subr.mxu0 0.0
    %2007 = vmatpush1.msra.mxu0 0.0
    %2008 = vmatprep.subr.mxu0 0.0
    %2009 = vmatpush1.msra.mxu0 0.0
    %2010 = vmatprep.subr.mxu0 0.0
    %2011 = vmatpush1.msra.mxu0 %v1980
    %2012 = vmatprep.subr.mxu0 0.0
    %2013 = vmatpush1.msra.mxu0 %v1979
    %2014 = vmatprep.subr.mxu0 0.0
    %2015 = vmatpush1.msra.mxu0 %v1978
    %2016 = vmatprep.subr.mxu0 0.0
    %2017 = vmatpush1.msra.mxu0 %v1977
    %2018 = vmatprep.subr.mxu0 0.0
    %2019 = vmatpush1.msra.mxu0 %v1976
    %2020 = vmatprep.subr.mxu0 0.0
    %2021 = vmatpush1.msra.mxu0 %v1975
    %2022 = vmatprep.subr.mxu0 0.0
    %2023 = vmatpush1.msra.mxu0 %v1974
    %2024 = vmatprep.subr.mxu0 0.0
    %2025 = vmatpush1.msra.mxu0 %v1973
    %2026 = vmatprep.subr.mxu0 0.0
    %2027 = vmatpush2.msra.mxu0 0.0
    %2028 = vmatprep.subr.mxu0 0.0
    %2029 = vmatpush2.msra.mxu0 0.0
    %2030 = vmatprep.subr.mxu0 0.0
    %2031 = vmatpush2.msra.mxu0 0.0
    %2032 = vmatprep.subr.mxu0 0.0
    %2033 = vmatpush2.msra.mxu0 0.0
    %2034 = vmatprep.subr.mxu0 0.0
    %2035 = vmatpush2.msra.mxu0 0.0
    %2036 = vmatprep.subr.mxu0 0.0
    %2037 = vmatpush2.msra.mxu0 0.0
    %2038 = vmatprep.subr.mxu0 0.0
    %2039 = vmatpush2.msra.mxu0 0.0
    %2040 = vmatprep.subr.mxu0 0.0
    %2041 = vmatpush2.msra.mxu0 0.0
    %2042 = vmatprep.subr.mxu0 0.0
    %2043 = vmatpush2.msra.mxu0 0.0
    %2044 = vmatprep.subr.mxu0 0.0
    %2045 = vmatpush2.msra.mxu0 0.0
    %2046 = vmatprep.subr.mxu0 0.0
    %2047 = vmatpush2.msra.mxu0 0.0
    %2048 = vmatprep.subr.mxu0 0.0
    %2049 = vmatpush2.msra.mxu0 0.0
    %2050 = vmatprep.subr.mxu0 0.0
    %2051 = vmatpush2.msra.mxu0 0.0
    %2052 = vmatprep.subr.mxu0 0.0
    %2053 = vmatpush2.msra.mxu0 0.0
    %2054 = vmatprep.subr.mxu0 0.0
    %2055 = vmatpush2.msra.mxu0 0.0
    %2056 = vmatprep.subr.mxu0 0.0
    %2057 = vmatpush2.msra.mxu0 0.0
    %2058 = vmatprep.mubr.f32.mxu0 0.0
    %2059 = vmatmul.mubr.f32.gmra.mxu0 %v1989
    %v2060 = vpop.f32.mrf.mxu0
    %v2061 = vadd.f32 %v1986, %v2060
    %v2062 = vpop.f32.mrf.mxu0
    %2063 = vmatprep.mubr.f32.mxu0 0.0
    %2064 = vmatmul.mubr.f32.gmra.mxu0 %v1992
    %v2065 = vpop.f32.mrf.mxu0
    %v2066 = vadd.f32 %v1986, %v2065
    %v2067 = vpop.f32.mrf.mxu0
    %2068 = vdwg.mxu0
    %v2069 = vadd.f32 %v2061, %v1869
    %v2070 = vadd.f32 %v2066, %v1870
    %v2071 = vld [vmem:[%s14] sm:$0x1]
    %v2072 = vld [vmem:[%s15] sm:$0x1]
    %v2073 = vsel %vm126, %v2069, 0.0
    %2074 = vadd.xlane.f32.xlu0 %v2073
    %v2075 = vpop.xlane.xlu0 %2074
    %v2076 = vsel %vm126, %v2070, 0.0
    %2077 = vadd.xlane.f32.xlu0 %v2076
    %v2078 = vpop.xlane.xlu0 %2077
    %v2079 = vmul.f32 %v2075, %v1834
    %v2080 = vmul.f32 %v2078, %v1834
    %v2081 = vsub.f32 %v2069, %v2079
    %v2082 = vsub.f32 %v2070, %v2080
    %v2083 = vmul.f32 %v2081, %v2081
    %v2084 = vmul.f32 %v2082, %v2082
    %v2085 = vsel %vm126, %v2083, 0.0
    %2086 = vadd.xlane.f32.xlu0 %v2085
    %v2087 = vpop.xlane.xlu0 %2086
    %v2088 = vsel %vm126, %v2084, 0.0
    %2089 = vadd.xlane.f32.xlu0 %v2088
    %v2090 = vpop.xlane.xlu0 %2089
    %v2091 = vmul.f32 %v2087, %v1834
    %v2092 = vmul.f32 %v2090, %v1834
    %v2093 = vadd.f32 %v2091, 1e-12
    %v2094 = vadd.f32 %v2092, 1e-12
    %v2095 = vrsqrt.pop %v2093
    %v2096 = vrsqrt.pop %v2094
    %v2097 = vmul.f32 %v2081, %v2095
    %v2098 = vmul.f32 %v2082, %v2096
    %v2100 = vlaneseq
    %v2101 = vshrl.u32 %v2100, 7
    %v2102 = vsub.s32 0, %v2101
    %v2103 = vrot.slane %v2071, %v2102
    %v2105 = vmul.f32 %v2097, %v2103
    %v2106 = vmul.f32 %v2098, %v2103
    %v2108 = vlaneseq
    %v2109 = vshrl.u32 %v2108, 7
    %v2110 = vsub.s32 0, %v2109
    %v2111 = vrot.slane %v2072, %v2110
    %v2113 = vadd.f32 %v2105, %v2111
    %v2114 = vadd.f32 %v2106, %v2111
    %2115 = vst.msk [vmem:[#allocation10] sm:$0xff] %vm126, %v2113
    %2116 = vst.msk [vmem:[#allocation10 + $0x8] sm:$0xff] %vm126, %v2114
    // Predicated region
    $region82: #{tpu_custom_call.1} parent=1 // pred_check
      _
    $region83: #{tpu_custom_call.1} parent=1 // pred_check_branch
      %2118 = sbr.rel (0) target = $region85
    $region84: #{tpu_custom_call.1} parent=1 // pred_region
      %s2120 = ssub.s32 256, 256
      %2121 = vsyncadd [#allocation4], %s2120
      %s2122 = sshll.u32 [#allocation10], 4
      %s2123 = int_to_ptr.vmem [resolvable:$true] %s2122
      %2128 = dma.vmem_to_hbm [thread:$0]  %s2123, 256, %s16, [#allocation4], 128, 128, 8
    $region85: #{tpu_custom_call.1} parent=1 // pred_fallthru
      _
    // Predicated region
    $region86: #{tpu_custom_call.1} parent=1 // pred_check
      _
    $region87: #{tpu_custom_call.1} parent=1 // pred_check_branch
      %2130 = sbr.rel (0) target = $region89
    $region88: #{tpu_custom_call.1} parent=1 // pred_region
      %2131 = dma.done [#allocation4], 256
    $region89: #{tpu_custom_call.1} parent=1 // pred_fallthru
      _
    %2132 = vsyncpa [#allocation3], 1
    %2133 = vsyncpa [#allocation6], 1
    %2134 = vsyncpa [#allocation9], 1
    %2135 = vsyncpa [#allocation4], 1

</llo_original>
